<compile_context>
chip_gen: v5e
topology: v5e:2x2
jax: 0.10.0
libtpu: 0.0.40
codegen_flags: <defaults>
</compile_context>

<pallas_src>
import functools
import math

import jax
import jax.numpy as jnp
from jax import lax
from jax.experimental import pallas as pl
from jax.experimental.pallas import tpu as pltpu


_VMEM_LIMIT = 32 * 1024 * 1024  # safe on v5e/v6e (128 MiB) and v7x (64 MiB)


def _largest_divisor_leq(n, cap):
    cap = max(1, min(n, cap))
    for d in range(cap, 0, -1):
        if n % d == 0:
            return d
    return 1


def _mix_rows_tile(rows):
    # ~256 KiB f32 blocks per operand (512 rows x 128 lanes), full if small.
    cap = min(rows, 512)
    for d in range(cap, 0, -1):
        if rows % d == 0 and (d % 8 == 0 or d == rows):
            return d
    return rows


# ----------------------------------------------------------------------------
# Pallas kernels
# ----------------------------------------------------------------------------
def _conv_kernel(*refs, taps, M, W, E, nH, HW, act, has_affine, has_res,
                 gate, fast):
    # refs: x, w, b, [scale, shift], [residual], out, [scratch]
    x_ref, w_ref, b_ref = refs[0], refs[1], refs[2]
    k = 3
    if has_affine:
        s_ref, t_ref = refs[3], refs[4]
        k = 5
    if has_res:
        r_ref = refs[k]
        k += 1
    else:
        r_ref = None
    o_ref = refs[k]
    scratch = refs[k + 1:]

    def prologue():
        # eval-mode BatchNorm affine + activation (f32 math, bf16 result)
        xa = x_ref[0].astype(jnp.float32)
        if has_affine:
            xa = xa * s_ref[...] + t_ref[...]
        if act == "leaky":
            xa = jnp.where(xa >= 0.0, xa, 0.01 * xa)
        elif act == "relu":
            xa = jnp.maximum(xa, 0.0)
        if E > 0 and has_affine:
            # conv zero-padding: halo rows outside the image must contribute 0,
            # but the affine shift maps padded zeros to `t`; mask them back to
            # zero once here (replaces the old per-tap H-boundary masks).
            h_tile = (pl.program_id(0) % nH) if nH > 1 else 0
            r = lax.broadcasted_iota(jnp.int32, (xa.shape[0], 1), 0)
            lo = E - h_tile * M
            hi = HW + E - h_tile * M
            xa = jnp.where((r >= lo) & (r < hi), xa, 0.0)
        return xa.astype(jnp.bfloat16)

    if fast:
        # pure 1x1 conv: no scratch round-trip, single MXU matmul
        acc = jnp.dot(prologue(), w_ref[0], preferred_element_type=jnp.float32)
    else:
        xs_ref = scratch[0]
        if gate:
            # the x block is resident across the Cout-tile axis; build once
            @pl.when(pl.program_id(1) == 0)
            def _():
                xs_ref[...] = prologue()
        else:
            xs_ref[...] = prologue()

        need_wmask = any(lo > 0 or hi < W for _, _, lo, hi in taps)
        if need_wmask:
            wcol = lax.broadcasted_iota(jnp.int32, (M, 1), 0) % W
        cout_t = o_ref.shape[-1]
        acc = jnp.zeros((M, cout_t), jnp.float32)
        for t_idx, start, lo_w, hi_w in taps:
            a = xs_ref[start:start + M, :]
            if lo_w > 0 or hi_w < W:
                # W-wrap mask applied to the cheap bf16 (M, Cin) operand
                a = jnp.where((wcol >= lo_w) & (wcol < hi_w), a, 0.0)
            acc = acc + jnp.dot(a, w_ref[t_idx],
                                preferred_element_type=jnp.float32)

    y = acc + b_ref[...]
    if has_res:
        y = y + r_ref[0].astype(jnp.float32)
    o_ref[0] = y.astype(o_ref.dtype)


def _layernorm_kernel(x_ref, w_ref, b_ref, o_ref):
    # LayerNorm over the F axis (axis=1 of the (tT, F, C) block), eps = 1e-5.
    x = x_ref[0].astype(jnp.float32)
    m = jnp.mean(x, axis=1, keepdims=True)
    v = jnp.mean(jnp.square(x - m), axis=1, keepdims=True)
    xn = (x - m) * lax.rsqrt(v + 1e-5)
    w = w_ref[...][:, :, None]                     # (1, F, 1)
    b = b_ref[...][:, :, None]
    o_ref[0] = (xn * w + b).astype(o_ref.dtype)


def _mix_kernel(syr_ref, syi_ref, twr_ref, twi_ref, ml_ref, my_ref,
                sxr_ref, sxi_ref, mx_ref):
    # py = normalize(sy), P = normalize(twiddle), m = sigmoid(mask) * |sy|
    # sx_hat = (py * P) * m (complex mult), mx_hat = |sx_hat|
    eps2 = 1e-14                                   # (1e-7)^2
    syr, syi = syr_ref[...], syi_ref[...]
    twr, twi = twr_ref[...], twi_ref[...]
    inv_ny = lax.rsqrt(jnp.maximum(syr * syr + syi * syi, eps2))
    inv_nt = lax.rsqrt(jnp.maximum(twr * twr + twi * twi, eps2))
    m = pl.reciprocal(1.0 + jnp.exp(-ml_ref[...]), approx=True) * my_ref[...]
    pyr, pyi = syr * inv_ny, syi * inv_ny
    pr, pi = twr * inv_nt, twi * inv_nt
    sxr = (pyr * pr - pyi * pi) * m
    sxi = (pyi * pr + pyr * pi) * m
    sxr_ref[...] = sxr
    sxi_ref[...] = sxi
    mx_ref[...] = jnp.sqrt(sxr * sxr + sxi * sxi)


# ----------------------------------------------------------------------------
# Pallas wrappers
# ----------------------------------------------------------------------------
@functools.partial(jax.jit, static_argnames=("act", "out_dtype"))
def conv2d(x, w, b, scale=None, shift=None, *, act="none", residual=None,
           out_dtype=jnp.bfloat16):
    """'same'-padded stride-1 conv (NHWC x, HWIO w) with fused per-channel
    affine (eval-mode BatchNorm) + activation prologue and fused bias /
    residual epilogue.  bf16 operands, f32 accumulation on the MXU."""
    N, H, W, Cin = x.shape
    KH, KW, _, Cout = w.shape
    ph, pw = KH // 2, KW // 2

    # statically live taps (drop whole kernel rows/cols when H/W < kernel)
    di0, di1 = max(0, ph - H + 1), min(KH, ph + H)
    dj0, dj1 = max(0, pw - W + 1), min(KW, pw + W)
    kh, kw = di1 - di0, dj1 - dj0
    ntaps = kh * kw
    taps = []
    for a_i, di in enumerate(range(di0, di1)):
        for a_j, dj in enumerate(range(dj0, dj1)):
            lo_w, hi_w = max(0, pw - dj), min(W, W + pw - dj)
            taps.append((a_i * kw + a_j, di * W + dj, lo_w, hi_w))
    taps = tuple(taps)

    E = ph * W + pw                                 # halo rows (flattened)

    # stream output channels for the deep, weight-DMA-bound layers
    tc = 128 if (Cout > 128 and Cout % 128 == 0) else Cout
    n_co = Cout // tc

    fast = (ntaps == 1 and E == 0 and n_co == 1)    # pure 1x1 conv fast path
    has_affine = scale is not None
    has_res = residual is not None

    # row tile: as large as the f32 accumulator comfortably allows
    m_cap = max(W, min(2048, (128 * 1024) // (4 * tc)))
    tH = _largest_divisor_leq(H, m_cap // W)
    nH = H // tH
    M = tH * W                                      # output rows per grid step
    Mext = M + 2 * E

    # flatten (H, W) -> rows, pad a thin zero halo
    xf = x.astype(jnp.bfloat16).reshape(N, H * W, Cin)
    if E > 0:
        xf = jnp.pad(xf, ((0, 0), (E, E), (0, 0)))
    if nH == 1:
        xt = xf.reshape(N, Mext, Cin)
    elif E == 0:
        xt = xf.reshape(N * nH, M, Cin)
    else:
        # overlapping row tiles with a thin halo
        # TODO(synk): could avoid this small HBM copy with manual halo DMA.
        tiles = [lax.slice(xf, (0, i * M, 0), (N, i * M + Mext, Cin))
                 for i in range(nH)]
        xt = jnp.stack(tiles, axis=1).reshape(N * nH, Mext, Cin)

    wt = w[di0:di1, dj0:dj1].reshape(ntaps, Cin, Cout).astype(jnp.bfloat16)
    b2 = b.reshape(1, Cout).astype(jnp.float32)

    G = N * nH
    in_specs = [
        pl.BlockSpec((1, Mext, Cin), lambda i, j: (i, 0, 0)),
        pl.BlockSpec((ntaps, Cin, tc), lambda i, j: (0, 0, j)),
        pl.BlockSpec((1, tc), lambda i, j: (0, j)),
    ]
    args = [xt, wt, b2]
    if has_affine:
        in_specs += [pl.BlockSpec((1, Cin), lambda i, j: (0, 0)),
                     pl.BlockSpec((1, Cin), lambda i, j: (0, 0))]
        args += [scale.reshape(1, Cin).astype(jnp.float32),
                 shift.reshape(1, Cin).astype(jnp.float32)]
    if has_res:
        in_specs.append(pl.BlockSpec((1, M, tc), lambda i, j: (i, 0, j)))
        args.append(residual.reshape(G, M, Cout))

    kernel = functools.partial(
        _conv_kernel, taps=taps, M=M, W=W, E=E, nH=nH, HW=H * W, act=act,
        has_affine=has_affine, has_res=has_res, gate=(n_co > 1), fast=fast)

    scratch = [] if fast else [pltpu.VMEM((Mext, Cin), jnp.bfloat16)]

    out = pl.pallas_call(
        kernel,
        out_shape=jax.ShapeDtypeStruct((G, M, Cout), out_dtype),
        grid=(G, n_co),
        in_specs=in_specs,
        out_specs=pl.BlockSpec((1, M, tc), lambda i, j: (i, 0, j)),
        scratch_shapes=scratch,
        compiler_params=pltpu.CompilerParams(
            dimension_semantics=("parallel", "arbitrary"),
            vmem_limit_bytes=_VMEM_LIMIT),
    )(*args)
    return out.reshape(N, H, W, Cout)


@jax.jit
def layernorm_freq(x, w, b):
    # LayerNorm(fft_size//2): normalize over the frequency axis (axis=2 NHWC).
    N, T, F, C = x.shape
    cap = max(1, (2 * 1024 * 1024) // (F * C * 2))   # ~2 MiB bf16 blocks
    tT = _largest_divisor_leq(T, cap)
    return pl.pallas_call(
        _layernorm_kernel,
        out_shape=jax.ShapeDtypeStruct((N, T, F, C), jnp.bfloat16),
        grid=(N, T // tT),
        in_specs=[
            pl.BlockSpec((1, tT, F, C), lambda n, t: (n, t, 0, 0)),
            pl.BlockSpec((1, F), lambda n, t: (0, 0)),
            pl.BlockSpec((1, F), lambda n, t: (0, 0)),
        ],
        out_specs=pl.BlockSpec((1, tT, F, C), lambda n, t: (n, t, 0, 0)),
        compiler_params=pltpu.CompilerParams(
            dimension_semantics=("parallel", "parallel"),
            vmem_limit_bytes=_VMEM_LIMIT),
    )(x, w.reshape(1, F), b.reshape(1, F))


@jax.jit
def mix(syr, syi, twr, twi, ml, my):
    shape = syr.shape
    total = syr.size
    lane = 128 if total % 128 == 0 else shape[-1]     # lane-dense layout
    rows = total // lane
    tm = _mix_rows_tile(rows)
    spec = pl.BlockSpec((tm, lane), lambda i: (i, 0))

    def flat(a):
        return a.astype(jnp.float32).reshape(rows, lane)

    outs = pl.pallas_call(
        _mix_kernel,
        out_shape=(jax.ShapeDtypeStruct((rows, lane), jnp.float32),) * 3,
        grid=(rows // tm,),
        in_specs=[spec] * 6,
        out_specs=(spec, spec, spec),
        compiler_params=pltpu.CompilerParams(
            dimension_semantics=("parallel",),
            vmem_limit_bytes=_VMEM_LIMIT),
    )(*(flat(a) for a in (syr, syi, twr, twi, ml, my)))
    return tuple(o.reshape(shape) for o in outs)


# ----------------------------------------------------------------------------
# Model building blocks (thin glue around the Pallas kernels)
# ----------------------------------------------------------------------------
def space_to_depth(x, f):
    N, H, W, C = x.shape
    x = x.reshape(N, H // f, f, W // f, f, C).transpose(0, 1, 3, 2, 4, 5)
    return x.reshape(N, H // f, W // f, f * f * C)


def depth_to_space(x, f, cout):
    N, H, W, _ = x.shape
    x = x.reshape(N, H, W, f, f, cout).transpose(0, 1, 3, 2, 4, 5)
    return x.reshape(N, H * f, W * f, cout)


def downsample(x, p, f, act):
    # BN -> act -> Conv(f, stride f)  ==  space-to-depth + 1x1 conv with the
    # per-channel affine + activation fused into the conv prologue.
    h = space_to_depth(x, f)
    kh, kw, cin, cout = p["w"].shape
    w = p["w"].reshape(1, 1, kh * kw * cin, cout)
    s = jnp.tile(p["bn_s"], f * f)
    t = jnp.tile(p["bn_t"], f * f)
    return conv2d(h, w, p["b"], s, t, act=act)


def upsample(x, p, f, act):
    # BN -> act -> ConvTranspose(f, stride f)  ==  1x1 conv to f*f*cout
    # (BN/act fused into the prologue) + depth-to-space.
    cin, _, _, cout = p["w"].shape                 # stored as (cin, f, f, cout)
    w = p["w"].reshape(1, 1, cin, f * f * cout)
    b = jnp.tile(p["b"], f * f)
    y = conv2d(x, w, b, p["bn_s"], p["bn_t"], act=act)
    return depth_to_space(y, f, cout)


def rc_block(x, p, act):
    s = conv2d(x, p["ws"], p["bs"], act="none")                         # skiper
    h = conv2d(x, p["w1"], p["b1"], p["bn1_s"], p["bn1_t"], act=act)
    h = conv2d(h, p["w2"], p["b2"], p["bn2_s"], p["bn2_t"], act=act,
               residual=s)                                              # + skip
    return h


def re_block(x, p, f, act="leaky"):
    e = x
    for bp in p["blocks"]:
        e = rc_block(e, bp, act)
    return downsample(e, p["down"], f, act), e


def rd_block(x, e, p, f, act="leaky"):
    h = upsample(x, p["up"], f, act) + e
    for bp in p["blocks"]:
        h = rc_block(h, bp, act)
    return h


def ic_block(x, p):
    for bp in p["blocks"]:
        x = rc_block(x, bp, "relu")
    return x


def prenet_fn(x, p):
    x = conv2d(x, p["w1"], p["b1"], act="none")
    x = layernorm_freq(x, p["ln1_w"], p["ln1_b"])
    x = conv2d(x, p["w2"], p["b2"], act="none")
    x = layernorm_freq(x, p["ln2_w"], p["ln2_b"])
    return x


def postnet_branch(x, p, running):
    h = layernorm_freq(x, p["ln1_w"], p["ln1_b"])
    h = conv2d(h, p["w1"], p["b1"], act="leaky")        # LeakyReLU fused
    h = layernorm_freq(h, p["ln2_w"], p["ln2_b"])
    h = conv2d(h, p["w2"], p["b2"], act="leaky", residual=running)
    return h


# ----------------------------------------------------------------------------
# STFT / iSTFT (plain JAX; no Pallas FFT primitive)
# ----------------------------------------------------------------------------
def hann_window(n_fft):
    n = jnp.arange(n_fft, dtype=jnp.float32)
    return 0.5 * (1.0 - jnp.cos(2.0 * jnp.pi * n / n_fft))


def stft(x, n_fft, hop, window):
    pad = n_fft // 2
    xp = jnp.pad(x, ((0, 0), (pad, pad)), mode="reflect")
    n_frames = 1 + x.shape[1] // hop
    idx = jnp.arange(n_frames)[:, None] * hop + jnp.arange(n_fft)[None, :]
    frames = xp[:, idx] * window[None, None, :]
    spec = jnp.fft.rfft(frames, axis=-1)                     # (B, T, F)
    out = jnp.stack([spec.real, spec.imag], axis=-1)         # (B, T, F, 2)
    return jnp.transpose(out, (0, 2, 1, 3))                  # (B, F, T, 2)


def istft(spec_ri, n_fft, hop, window):
    B = spec_ri.shape[0]
    spec = spec_ri[..., 0] + 1j * spec_ri[..., 1]            # (B, F, T)
    frames = jnp.fft.irfft(spec, n=n_fft, axis=1)            # (B, n_fft, T)
    frames = frames * window[None, :, None]
    T = frames.shape[-1]
    out_len = n_fft + (T - 1) * hop
    # vectorized overlap-add: one scatter-add instead of T sequential updates
    idx = (jnp.arange(T)[:, None] * hop + jnp.arange(n_fft)[None, :]).reshape(-1)
    vals = jnp.transpose(frames, (0, 2, 1)).reshape(B, -1)
    y = jnp.zeros((B, out_len), jnp.float32).at[:, idx].add(vals)
    wsum = jnp.zeros((out_len,), jnp.float32).at[idx].add(
        jnp.tile(window * window, T))
    y = y / jnp.where(wsum > 1e-11, wsum, 1.0)
    pad = n_fft // 2
    return y[:, pad:pad + (T - 1) * hop]


# ----------------------------------------------------------------------------
# Deterministic parameter construction
# ----------------------------------------------------------------------------
class KeyGen:
    def __init__(self, key):
        self.key = key

    def __call__(self):
        self.key, k = jax.random.split(self.key)
        return k


_BN_SCALE = 1.0 / math.sqrt(1.0 + 1e-5)   # eval BN: mean=0, var=1, gamma=1, beta=0


def conv_p(kg, kh, kw, cin, cout):
    fan_in, fan_out = cin * kh * kw, cout * kh * kw
    lim = math.sqrt(6.0 / (fan_in + fan_out))                # xavier_uniform
    w = jax.random.uniform(kg(), (kh, kw, cin, cout), jnp.float32, -lim, lim)
    return w.astype(jnp.bfloat16), jnp.zeros((cout,), jnp.float32)


def bn_p(c):
    return jnp.full((c,), _BN_SCALE, jnp.float32), jnp.zeros((c,), jnp.float32)


def rc_p(kg, c, k=3):
    inner = max(16, c // 2)
    b1s, b1t = bn_p(c)
    w1, bb1 = conv_p(kg, k, k, c, inner)
    b2s, b2t = bn_p(inner)
    w2, bb2 = conv_p(kg, k, k, inner, c)
    ws, bs = conv_p(kg, 1, 1, c, c)
    return dict(bn1_s=b1s, bn1_t=b1t, w1=w1, b1=bb1,
                bn2_s=b2s, bn2_t=b2t, w2=w2, b2=bb2, ws=ws, bs=bs)


def re_p(kg, cin, cout, f):
    blocks = [rc_p(kg, cin) for _ in range(4)]
    bs_, bt_ = bn_p(cin)
    w, b = conv_p(kg, f, f, cin, cout)
    return dict(blocks=blocks, down=dict(bn_s=bs_, bn_t=bt_, w=w, b=b))


def rd_p(kg, cin, cout, f):
    bs_, bt_ = bn_p(cin)
    lim = math.sqrt(1.0 / (cin * f * f))
    w = jax.random.uniform(kg(), (cin, f, f, cout), jnp.float32,
                           -lim, lim).astype(jnp.bfloat16)
    b = jnp.zeros((cout,), jnp.float32)
    blocks = [rc_p(kg, cout) for _ in range(4)]
    return dict(up=dict(bn_s=bs_, bn_t=bt_, w=w, b=b), blocks=blocks)


def ic_p(kg, c):
    return dict(blocks=[rc_p(kg, c) for _ in range(4)])


def build_params(key, fft_size, factors):
    kg = KeyGen(key)
    F = fft_size // 2
    chans = [32, 64, 128, 192, 256, 384, 512]
    w1, b1 = conv_p(kg, 1, 1, 2, 32)
    w2, b2 = conv_p(kg, 1, 1, 32, 32)
    prenet = dict(w1=w1, b1=b1, ln1_w=jnp.ones((F,), jnp.float32),
                  ln1_b=jnp.zeros((F,), jnp.float32),
                  w2=w2, b2=b2, ln2_w=jnp.ones((F,), jnp.float32),
                  ln2_b=jnp.zeros((F,), jnp.float32))
    enc = [re_p(kg, chans[i], chans[i + 1], factors[i]) for i in range(6)]
    bottle = [ic_p(kg, 512) for _ in range(4)]
    dec = [rd_p(kg, chans[i + 1], chans[i], factors[i]) for i in range(6)]
    postnet = []
    for k in (3, 5, 7):
        pw1, pb1 = conv_p(kg, k, k, 32, 32)
        pw2, pb2 = conv_p(kg, k, k, 32, 32)
        postnet.append(dict(ln1_w=jnp.ones((F,), jnp.float32),
                            ln1_b=jnp.zeros((F,), jnp.float32), w1=pw1, b1=pb1,
                            ln2_w=jnp.ones((F,), jnp.float32),
                            ln2_b=jnp.zeros((F,), jnp.float32), w2=pw2, b2=pb2))
    mw, mb = conv_p(kg, 1, 1, 32, 1)
    tw, tb = conv_p(kg, 1, 1, 32, 2)
    return dict(prenet=prenet, enc=enc, bottle=bottle, dec=dec, postnet=postnet,
                mask_w=mw, mask_b=mb, tw_w=tw, tw_b=tb)


# ----------------------------------------------------------------------------
# Full forward pass (matches ResUNetDecouple.forward, eval semantics)
# ----------------------------------------------------------------------------
def forward(params, x, y, fft_size, hop_size, factors):
    window = hann_window(fft_size)
    sx = stft(x, fft_size, hop_size, window)[:, :-1, :-1]    # (B, F, T, 2)
    sy = stft(y, fft_size, hop_size, window)[:, :-1, :-1]
    mx = jnp.sqrt(jnp.sum(sx * sx, axis=-1))                 # (B, F, T)
    my = jnp.sqrt(jnp.sum(sy * sy, axis=-1))

    # prenet input: NCHW (B, 2, T, F) -> NHWC (B, T, F, 2)
    h = jnp.transpose(sy, (0, 2, 1, 3))
    h = prenet_fn(h, params["prenet"])

    skips = []
    for i in range(6):
        h, e = re_block(h, params["enc"][i], factors[i], act="leaky")
        skips.append(e)

    for j in range(4):
        h = ic_block(h, params["bottle"][j])
        # dropout2d(p=0.1) is identity in eval mode.

    for i in reversed(range(6)):
        h = rd_block(h, skips[i], params["dec"][i], factors[i], act="leaky")

    x0 = h
    total = x0
    for bp in params["postnet"]:
        total = postnet_branch(x0, bp, total)                # x0 + sum(branches)

    # mask + twiddle heads fused into one Cout=3 1x1 conv; the final LeakyReLU
    # is fused into its prologue.
    head_w = jnp.concatenate([params["mask_w"], params["tw_w"]], axis=-1)
    head_b = jnp.concatenate([params["mask_b"], params["tw_b"]], axis=0)
    head = conv2d(total, head_w, head_b, act="leaky", out_dtype=jnp.float32)
    mask_logits = head[..., 0]                               # (B, T, F)
    twid = head[..., 1:3]                                    # (B, T, F, 2)
    ml_ft = jnp.transpose(mask_logits, (0, 2, 1))            # (B, F, T)
    tw_ft = jnp.transpose(twid, (0, 2, 1, 3))                # (B, F, T, 2)

    sxr, sxi, mx_hat = mix(sy[..., 0], sy[..., 1],
                           tw_ft[..., 0], tw_ft[..., 1], ml_ft, my)
    sx_hat = jnp.stack([sxr, sxi], axis=-1)                  # (B, F, T, 2)

    sx_pad = jnp.pad(sx_hat, ((0, 0), (0, 1), (0, 0), (0, 0)))   # Nyquist bin
    x_hat = istft(sx_pad, fft_size, hop_size, window)
    return x_hat, (mx, mx_hat), (sx, sx_hat)


# ----------------------------------------------------------------------------
if __name__ == "__main__":
    fft_size, hop_size = 128, 32
    factors = (2, 2, 2, 2, 2, 2)          # prod = 64 ; fft_size//2 % 64 == 0
    B = 1
    L = 64 * hop_size                      # -> 64 frames after trimming

    key = jax.random.PRNGKey(0)
    kx, ky, kp = jax.random.split(key, 3)
    x = 0.1 * jax.random.normal(kx, (B, L), jnp.float32)
    y = 0.1 * jax.random.normal(ky, (B, L), jnp.float32)

    params = build_params(kp, fft_size, factors)
    out = forward(params, x, y, fft_size, hop_size, factors)
    jax.block_until_ready(out)

    x_hat, (mx, mx_hat), (sx, sx_hat) = out
    assert x_hat.shape == (B, (L // hop_size - 1) * hop_size)
    assert mx.shape == mx_hat.shape == (B, fft_size // 2, L // hop_size)
    assert sx.shape == sx_hat.shape == (B, fft_size // 2, L // hop_size, 2)
    print("KERNEL_OK")
</pallas_src>

<mosaic_0001>
module attributes {stable_mosaic.version = 11 : i64} {
  func.func @_conv_kernel(%arg0: i32, %arg1: i32, %arg2: memref<1x1024x2xbf16, #tpu.memory_space<vmem>>, %arg3: memref<1x2x32xbf16, #tpu.memory_space<vmem>>, %arg4: memref<1x32xf32, #tpu.memory_space<vmem>>, %arg5: memref<1x1024x32xbf16, #tpu.memory_space<vmem>>) attributes {dimension_semantics = [#tpu.dimension_semantics<parallel>, #tpu.dimension_semantics<arbitrary>], iteration_bounds = array<i64: 4, 1>, scalar_prefetch = 0 : i64, scratch_operands = 0 : i64, tpu.core_type = #tpu.core_type<tc>, window_params = [{transform_indices = @transform_0, window_bounds = array<i64: 1, 1024, 2>}, {transform_indices = @transform_1, window_bounds = array<i64: 1, 2, 32>}, {transform_indices = @transform_2, window_bounds = array<i64: 1, 32>}, {transform_indices = @transform_3, window_bounds = array<i64: 1, 1024, 32>}]} {
    %c0 = arith.constant 0 : index
    %c0_0 = arith.constant 0 : index
    %c0_1 = arith.constant 0 : index
    %0 = vector.load %arg2[%c0, %c0_0, %c0_1] : memref<1x1024x2xbf16, #tpu.memory_space<vmem>>, vector<1x1024x2xbf16>
    %1 = vector.shape_cast %0 : vector<1x1024x2xbf16> to vector<1024x2xbf16>
    %2 = arith.extf %1 : vector<1024x2xbf16> to vector<1024x2xf32>
    %3 = arith.truncf %2 : vector<1024x2xf32> to vector<1024x2xbf16>
    %c0_2 = arith.constant 0 : index
    %c0_3 = arith.constant 0 : index
    %c0_4 = arith.constant 0 : index
    %4 = vector.load %arg3[%c0_2, %c0_3, %c0_4] : memref<1x2x32xbf16, #tpu.memory_space<vmem>>, vector<1x2x32xbf16>
    %5 = vector.shape_cast %4 : vector<1x2x32xbf16> to vector<2x32xbf16>
    %cst = arith.constant dense<0.000000e+00> : vector<1024x32xf32>
    %6 = tpu.matmul %3, %5, %cst {dimension_numbers = #tpu.dot_dimension_numbers<[1], [0], [0], [1], [0, 0, 1, 1], [], []>} : vector<1024x2xbf16>, vector<2x32xbf16>, vector<1024x32xf32> -> vector<1024x32xf32>
    %c0_5 = arith.constant 0 : index
    %c0_6 = arith.constant 0 : index
    %7 = vector.load %arg4[%c0_5, %c0_6] : memref<1x32xf32, #tpu.memory_space<vmem>>, vector<1x32xf32>
    %8 = vector.broadcast %7 : vector<1x32xf32> to vector<1024x32xf32>
    %9 = arith.addf %6, %8 : vector<1024x32xf32>
    %10 = arith.truncf %9 : vector<1024x32xf32> to vector<1024x32xbf16>
    %c0_7 = arith.constant 0 : index
    %c0_8 = arith.constant 0 : index
    %c0_9 = arith.constant 0 : index
    %11 = vector.load %arg5[%c0_7, %c0_8, %c0_9] : memref<1x1024x32xbf16, #tpu.memory_space<vmem>>, vector<1x1024x32xbf16>
    %12 = vector.shape_cast %11 : vector<1x1024x32xbf16> to vector<1024x32xbf16>
    %13 = vector.shape_cast %10 : vector<1024x32xbf16> to vector<1x1024x32xbf16>
    tpu.vector_store %arg5[%c0_7, %c0_8, %c0_9], %13 {strides = array<i32>} : memref<1x1024x32xbf16, #tpu.memory_space<vmem>>, vector<1x1024x32xbf16>,
    return
  }
  func.func @transform_0(%arg0: i32, %arg1: i32) -> (i32, i32, i32) {
    %c0_i32 = arith.constant 0 : i32
    %c0_i32_0 = arith.constant 0 : i32
    %c0_i32_1 = arith.constant 0 : i32
    return %arg0, %c0_i32, %c0_i32_0 : i32, i32, i32
  }
  func.func @transform_1(%arg0: i32, %arg1: i32) -> (i32, i32, i32) {
    %c0_i32 = arith.constant 0 : i32
    %c0_i32_0 = arith.constant 0 : i32
    %c0_i32_1 = arith.constant 0 : i32
    return %c0_i32, %c0_i32_0, %arg1 : i32, i32, i32
  }
  func.func @transform_2(%arg0: i32, %arg1: i32) -> (i32, i32) {
    %c0_i32 = arith.constant 0 : i32
    %c0_i32_0 = arith.constant 0 : i32
    return %c0_i32, %arg1 : i32, i32
  }
  func.func @transform_3(%arg0: i32, %arg1: i32) -> (i32, i32, i32) {
    %c0_i32 = arith.constant 0 : i32
    %c0_i32_0 = arith.constant 0 : i32
    return %arg0, %c0_i32, %arg1 : i32, i32, i32
  }
}

</mosaic_0001>

<llo_original>
// kernel: conv2d.1
$region0: #{conv2d.1}
  #allocation0 [shape = 'u32[]', space=smem, size = 0x4, offset = 0x4, fixed_abs, tag = 'smem constant byte address 0x4 - core index']
  #allocation1 [shape = 'u32[72,128]{1,0:T(1,128)}', space=vmem, size = 0x9000, scoped, tag = 'internal scratch']
  %s0 = inlined_call_operand.vmem [shape: bf16[4,1024,2], index: 0, kind: input, shape index: {}]
  %s1 = inlined_call_operand.vmem [shape: bf16[1,2,32], index: 1, kind: input, shape index: {}]
  %s2 = inlined_call_operand.vmem [shape: f32[1,32], index: 2, kind: input, shape index: {}]
  %s3 = inlined_call_operand.vmem [shape: bf16[4,1024,32], index: 3, kind: output, shape index: {}]
  %s4 = sld [smem:[#allocation0]]
  $region45: #{conv2d.1} parent=0
    _
  %s6 = ssub.s32 1, %s4
  %s7 = scalar_select 0, %s6, %s4
  loop: start=0, step=1, limit=6
  $region2: #{conv2d.1} parent=0 // loop_pre_header
    _
  $region3: #{conv2d.1} parent=0 // loop_header
    %s9 = sphi 0, %s13
    %p10 = scmp.ge.s32.totalorder %s9, 6
    %s16 = sphi 0, %s28
    %s17 = sphi 0, %s24
    %s18 = sphi 0, %s16
    %s19 = sphi 0, %s17
    %s20 = sphi 0, %s18
    %s21 = sphi 0, %s19
    %s31 = sphi 0, %s33
    %s34 = sphi 0, %s31
    %s35 = sphi 0, %s34
    %s51 = sphi 0, %s35
    %s57 = sphi 0, %s59
    %s60 = sphi 0, %s57
    %s61 = sphi 0, %s60
    %s77 = sphi 0, %s61
    %s83 = sphi 0, %s85
    %s86 = sphi 0, %s83
    %s87 = sphi 0, %s86
    %s103 = sphi 0, %s87
    %s111 = sphi 0, %s113
    %s114 = sphi 0, %s111
    %s115 = sphi 0, %s114
    %s131 = sphi 0, %s115
  $region4: #{conv2d.1} parent=0 // loop_header_branch
    %12 = sbr.rel (%p10) target = $region8
  $region5: #{conv2d.1} parent=0 // loop_body
    %s14 = ssub.s32 %s9, 1
    %s15 = ssub.s32 %s9, 2
    %s22 = sadd.s32 1, %s17
    %p23 = scmp.ge.s32.totalorder %s22, 1
    %s24 = scalar_select %p23, 0, %s22
    %s25 = sadd.s32 1, %s16
    %s26 = scalar_select %p23, %s25, %s16
    %p27 = scmp.ge.s32.totalorder %s26, 4
    %s28 = scalar_select %p27, 0, %s26
    %s29 = ssub.s32 %s16, %s28
    %p30 = scmp.eq.s32.totalorder %s29, 0
    %s32 = sadd.s32 %s31, 1
    %s33 = scalar_select %p30, %s31, %s32
    %p36 = pneg %p30
    %p37 = scmp.eq.s32.totalorder %s9, 3
    %p38 = por %p36, %p37
    %p39 = scmp.ne.s32.totalorder %s31, %s34
    %p40 = scmp.eq.s32.totalorder %s9, 0
    %p41 = por %p39, %p40
    %p42 = scmp.ne.s32.totalorder %s31, %s34
    %p43 = scmp.eq.s32.totalorder %s14, 3
    %p44 = por %p42, %p43
    %p45 = scmp.ne.s32.totalorder %s34, %s35
    %p46 = scmp.eq.s32.totalorder %s14, 0
    %p47 = por %p45, %p46
    %p48 = scmp.ne.s32.totalorder %s34, %s35
    %p49 = scmp.eq.s32.totalorder %s15, 3
    %p50 = por %p48, %p49
    %p52 = scmp.ne.s32.totalorder %s35, %s51
    %p53 = scmp.eq.s32.totalorder %s15, 0
    %p54 = por %p52, %p53
    %s55 = ssub.s32 %s17, %s24
    %p56 = scmp.eq.s32.totalorder %s55, 0
    %s58 = sadd.s32 %s57, 1
    %s59 = scalar_select %p56, %s57, %s58
    %p62 = pneg %p56
    %p63 = scmp.eq.s32.totalorder %s9, 3
    %p64 = por %p62, %p63
    %p65 = scmp.ne.s32.totalorder %s57, %s60
    %p66 = scmp.eq.s32.totalorder %s9, 0
    %p67 = por %p65, %p66
    %p68 = scmp.ne.s32.totalorder %s57, %s60
    %p69 = scmp.eq.s32.totalorder %s14, 3
    %p70 = por %p68, %p69
    %p71 = scmp.ne.s32.totalorder %s60, %s61
    %p72 = scmp.eq.s32.totalorder %s14, 0
    %p73 = por %p71, %p72
    %p74 = scmp.ne.s32.totalorder %s60, %s61
    %p75 = scmp.eq.s32.totalorder %s15, 3
    %p76 = por %p74, %p75
    %p78 = scmp.ne.s32.totalorder %s61, %s77
    %p79 = scmp.eq.s32.totalorder %s15, 0
    %p80 = por %p78, %p79
    %s81 = ssub.s32 %s17, %s24
    %p82 = scmp.eq.s32.totalorder %s81, 0
    %s84 = sadd.s32 %s83, 1
    %s85 = scalar_select %p82, %s83, %s84
    %p88 = pneg %p82
    %p89 = scmp.eq.s32.totalorder %s9, 3
    %p90 = por %p88, %p89
    %p91 = scmp.ne.s32.totalorder %s83, %s86
    %p92 = scmp.eq.s32.totalorder %s9, 0
    %p93 = por %p91, %p92
    %p94 = scmp.ne.s32.totalorder %s83, %s86
    %p95 = scmp.eq.s32.totalorder %s14, 3
    %p96 = por %p94, %p95
    %p97 = scmp.ne.s32.totalorder %s86, %s87
    %p98 = scmp.eq.s32.totalorder %s14, 0
    %p99 = por %p97, %p98
    %p100 = scmp.ne.s32.totalorder %s86, %s87
    %p101 = scmp.eq.s32.totalorder %s15, 3
    %p102 = por %p100, %p101
    %p104 = scmp.ne.s32.totalorder %s87, %s103
    %p105 = scmp.eq.s32.totalorder %s15, 0
    %p106 = por %p104, %p105
    %s107 = ssub.s32 %s16, %s28
    %s108 = ssub.s32 %s17, %s24
    %s109 = sor.u32 %s107, %s108
    %p110 = scmp.eq.s32.totalorder %s109, 0
    %s112 = sadd.s32 %s111, 1
    %s113 = scalar_select %p110, %s111, %s112
    %p116 = pneg %p110
    %p117 = scmp.eq.s32.totalorder %s9, 3
    %p118 = por %p116, %p117
    %p119 = scmp.ne.s32.totalorder %s111, %s114
    %p120 = scmp.eq.s32.totalorder %s9, 0
    %p121 = por %p119, %p120
    %p122 = scmp.ne.s32.totalorder %s111, %s114
    %p123 = scmp.eq.s32.totalorder %s14, 3
    %p124 = por %p122, %p123
    %p125 = scmp.ne.s32.totalorder %s114, %s115
    %p126 = scmp.eq.s32.totalorder %s14, 0
    %p127 = por %p125, %p126
    %p128 = scmp.ne.s32.totalorder %s114, %s115
    %p129 = scmp.eq.s32.totalorder %s15, 3
    %p130 = por %p128, %p129
    %p132 = scmp.ne.s32.totalorder %s115, %s131
    %p133 = scmp.eq.s32.totalorder %s15, 0
    %p134 = por %p132, %p133
    %p135 = scmp.le.s32.totalorder 1, %s9
    %p136 = scmp.lt.s32.totalorder %s9, 5
    %p137 = pnand %p135, %p136
    %p138 = pneg %p137
    // Predicated region
    $region9: #{conv2d.1} parent=5 // pred_check
      _
    $region10: #{conv2d.1} parent=5 // pred_check_branch
      %140 = sbr.rel (%p137) target = $region12
    $region11: #{conv2d.1} parent=5 // pred_region
      %s141 = ssub.s32 %s9, 1
      // Predicated region
      $region13: #{conv2d.1} parent=11 // pred_check
        %p142 = pneg %p73
      $region14: #{conv2d.1} parent=11 // pred_check_branch
        %144 = sbr.rel (%p142) target = $region16
      $region15: #{conv2d.1} parent=11 // pred_region
        %p145 = scmp.lt.s32.totalorder %s19, 0
        %s146 = scalar_select %p145, %s19, 0
        %s147 = scalar_lea.vmem %s1, %s146
      $region16: #{conv2d.1} parent=11 // pred_fallthru
        _
      // Predicated region
      $region17: #{conv2d.1} parent=11 // pred_check
        %p148 = pneg %p99
      $region18: #{conv2d.1} parent=11 // pred_check_branch
        %150 = sbr.rel (%p148) target = $region20
      $region19: #{conv2d.1} parent=11 // pred_region
        %p151 = scmp.lt.s32.totalorder %s19, 0
        %s152 = scalar_select %p151, %s19, 0
        %s153 = scalar_lea.vmem %s2, %s152
      $region20: #{conv2d.1} parent=11 // pred_fallthru
        _
    $region12: #{conv2d.1} parent=5 // pred_fallthru
      _
    %p154 = scmp.lt.s32.totalorder %s9, 4
    // Predicated region
    $region21: #{conv2d.1} parent=5 // pred_check
      %p155 = pneg %p154
    $region22: #{conv2d.1} parent=5 // pred_check_branch
      %157 = sbr.rel (%p155) target = $region24
    $region23: #{conv2d.1} parent=5 // pred_region
      // Predicated region
      $region25: #{conv2d.1} parent=23 // pred_check
        %p158 = pneg %p41
      $region26: #{conv2d.1} parent=23 // pred_check_branch
        %160 = sbr.rel (%p158) target = $region28
      $region27: #{conv2d.1} parent=23 // pred_region
        %p161 = scmp.lt.s32.totalorder %s16, 3
        %s162 = scalar_select %p161, %s16, 3
        %s163 = smul.addr %s162, 128
        %s164 = smul.addr %s163, 4
        %s165 = scalar_lea.vmem %s0, %s164
      $region28: #{conv2d.1} parent=23 // pred_fallthru
        _
    $region24: #{conv2d.1} parent=5 // pred_fallthru
      _
    %p166 = scmp.le.s32.totalorder 1, %s9
    %p167 = scmp.lt.s32.totalorder %s9, 5
    %p168 = pnand %p166, %p167
    %p169 = pneg %p168
    // Predicated region
    $region29: #{conv2d.1} parent=5 // pred_check
      _
    $region30: #{conv2d.1} parent=5 // pred_check_branch
      %171 = sbr.rel (%p168) target = $region32
    $region31: #{conv2d.1} parent=5 // pred_region
      %s172 = ssub.s32 %s9, 1
      %p173 = scmp.lt.s32.totalorder %s18, 3
      %s174 = scalar_select %p173, %s18, 3
      %s175 = smul.addr %s174, 128
      %s176 = smul.addr %s175, 4
      %s177 = scalar_lea.vmem %s0, %s176
      %p178 = pneg %p47
      %p179 = pneg %p44
      %p180 = scmp.lt.s32.totalorder %s19, 0
      %s181 = scalar_select %p180, %s19, 0
      %s182 = scalar_lea.vmem %s1, %s181
      %p183 = pneg %p73
      %p184 = pneg %p70
      %p185 = scmp.lt.s32.totalorder %s19, 0
      %s186 = scalar_select %p185, %s19, 0
      %s187 = scalar_lea.vmem %s2, %s186
      %p188 = pneg %p99
      %p189 = pneg %p96
      %p190 = pneg %p127
      %p191 = pneg %p124
      %p192 = scmp.lt.s32.totalorder %s18, 3
      %s193 = scalar_select %p192, %s18, 3
      %p194 = scmp.lt.s32.totalorder %s19, 0
      %s195 = scalar_select %p194, %s19, 0
      %s196 = smul.addr %s193, 128
      %s197 = sadd.s32 %s195, %s196
      %s198 = smul.addr %s197, 4
      %s199 = scalar_lea.vmem %s3, %s198
      %p200 = scmp.lt.s32.totalorder %s18, 3
      %s201 = scalar_select %p200, %s18, 3
      %s202 = smul.addr %s201, 128
      %s203 = smul.addr %s202, 4
      %s204 = scalar_lea.vmem %s0, %s203
      %p205 = scmp.lt.s32.totalorder %s19, 0
      %s206 = scalar_select %p205, %s19, 0
      %s207 = scalar_lea.vmem %s1, %s206
      %p208 = scmp.lt.s32.totalorder %s19, 0
      %s209 = scalar_select %p208, %s19, 0
      %s210 = scalar_lea.vmem %s2, %s209
      %p211 = scmp.lt.s32.totalorder %s18, 3
      %s212 = scalar_select %p211, %s18, 3
      %p213 = scmp.lt.s32.totalorder %s19, 0
      %s214 = scalar_select %p213, %s19, 0
      %s215 = smul.addr %s212, 128
      %s216 = sadd.s32 %s214, %s215
      %s217 = smul.addr %s216, 4
      %s218 = scalar_lea.vmem %s3, %s217
      %v220 = vld [vmem:[%s204] sm:$0xf]
      %v221 = vld [vmem:[%s204 + $0x4] sm:$0xf]
      %v222 = vld [vmem:[%s204 + $0x8] sm:$0xf]
      %v223 = vld [vmem:[%s204 + $0xc] sm:$0xf]
      %v224 = vld [vmem:[%s204 + $0x10] sm:$0xf]
      %v225 = vld [vmem:[%s204 + $0x14] sm:$0xf]
      %v226 = vld [vmem:[%s204 + $0x18] sm:$0xf]
      %v227 = vld [vmem:[%s204 + $0x1c] sm:$0xf]
      %v228 = vld [vmem:[%s204 + $0x20] sm:$0xf]
      %v229 = vld [vmem:[%s204 + $0x24] sm:$0xf]
      %v230 = vld [vmem:[%s204 + $0x28] sm:$0xf]
      %v231 = vld [vmem:[%s204 + $0x2c] sm:$0xf]
      %v232 = vld [vmem:[%s204 + $0x30] sm:$0xf]
      %v233 = vld [vmem:[%s204 + $0x34] sm:$0xf]
      %v234 = vld [vmem:[%s204 + $0x38] sm:$0xf]
      %v235 = vld [vmem:[%s204 + $0x3c] sm:$0xf]
      %v236 = vld [vmem:[%s204 + $0x40] sm:$0xf]
      %v237 = vld [vmem:[%s204 + $0x44] sm:$0xf]
      %v238 = vld [vmem:[%s204 + $0x48] sm:$0xf]
      %v239 = vld [vmem:[%s204 + $0x4c] sm:$0xf]
      %v240 = vld [vmem:[%s204 + $0x50] sm:$0xf]
      %v241 = vld [vmem:[%s204 + $0x54] sm:$0xf]
      %v242 = vld [vmem:[%s204 + $0x58] sm:$0xf]
      %v243 = vld [vmem:[%s204 + $0x5c] sm:$0xf]
      %v244 = vld [vmem:[%s204 + $0x60] sm:$0xf]
      %v245 = vld [vmem:[%s204 + $0x64] sm:$0xf]
      %v246 = vld [vmem:[%s204 + $0x68] sm:$0xf]
      %v247 = vld [vmem:[%s204 + $0x6c] sm:$0xf]
      %v248 = vld [vmem:[%s204 + $0x70] sm:$0xf]
      %v249 = vld [vmem:[%s204 + $0x74] sm:$0xf]
      %v250 = vld [vmem:[%s204 + $0x78] sm:$0xf]
      %v251 = vld [vmem:[%s204 + $0x7c] sm:$0xf]
      %v252 = vld [vmem:[%s204 + $0x80] sm:$0xf]
      %v253 = vld [vmem:[%s204 + $0x84] sm:$0xf]
      %v254 = vld [vmem:[%s204 + $0x88] sm:$0xf]
      %v255 = vld [vmem:[%s204 + $0x8c] sm:$0xf]
      %v256 = vld [vmem:[%s204 + $0x90] sm:$0xf]
      %v257 = vld [vmem:[%s204 + $0x94] sm:$0xf]
      %v258 = vld [vmem:[%s204 + $0x98] sm:$0xf]
      %v259 = vld [vmem:[%s204 + $0x9c] sm:$0xf]
      %v260 = vld [vmem:[%s204 + $0xa0] sm:$0xf]
      %v261 = vld [vmem:[%s204 + $0xa4] sm:$0xf]
      %v262 = vld [vmem:[%s204 + $0xa8] sm:$0xf]
      %v263 = vld [vmem:[%s204 + $0xac] sm:$0xf]
      %v264 = vld [vmem:[%s204 + $0xb0] sm:$0xf]
      %v265 = vld [vmem:[%s204 + $0xb4] sm:$0xf]
      %v266 = vld [vmem:[%s204 + $0xb8] sm:$0xf]
      %v267 = vld [vmem:[%s204 + $0xbc] sm:$0xf]
      %v268 = vld [vmem:[%s204 + $0xc0] sm:$0xf]
      %v269 = vld [vmem:[%s204 + $0xc4] sm:$0xf]
      %v270 = vld [vmem:[%s204 + $0xc8] sm:$0xf]
      %v271 = vld [vmem:[%s204 + $0xcc] sm:$0xf]
      %v272 = vld [vmem:[%s204 + $0xd0] sm:$0xf]
      %v273 = vld [vmem:[%s204 + $0xd4] sm:$0xf]
      %v274 = vld [vmem:[%s204 + $0xd8] sm:$0xf]
      %v275 = vld [vmem:[%s204 + $0xdc] sm:$0xf]
      %v276 = vld [vmem:[%s204 + $0xe0] sm:$0xf]
      %v277 = vld [vmem:[%s204 + $0xe4] sm:$0xf]
      %v278 = vld [vmem:[%s204 + $0xe8] sm:$0xf]
      %v279 = vld [vmem:[%s204 + $0xec] sm:$0xf]
      %v280 = vld [vmem:[%s204 + $0xf0] sm:$0xf]
      %v281 = vld [vmem:[%s204 + $0xf4] sm:$0xf]
      %v282 = vld [vmem:[%s204 + $0xf8] sm:$0xf]
      %v283 = vld [vmem:[%s204 + $0xfc] sm:$0xf]
      %v284 = vld [vmem:[%s204 + $0x100] sm:$0xf]
      %v285 = vld [vmem:[%s204 + $0x104] sm:$0xf]
      %v286 = vld [vmem:[%s204 + $0x108] sm:$0xf]
      %v287 = vld [vmem:[%s204 + $0x10c] sm:$0xf]
      %v288 = vld [vmem:[%s204 + $0x110] sm:$0xf]
      %v289 = vld [vmem:[%s204 + $0x114] sm:$0xf]
      %v290 = vld [vmem:[%s204 + $0x118] sm:$0xf]
      %v291 = vld [vmem:[%s204 + $0x11c] sm:$0xf]
      %v292 = vld [vmem:[%s204 + $0x120] sm:$0xf]
      %v293 = vld [vmem:[%s204 + $0x124] sm:$0xf]
      %v294 = vld [vmem:[%s204 + $0x128] sm:$0xf]
      %v295 = vld [vmem:[%s204 + $0x12c] sm:$0xf]
      %v296 = vld [vmem:[%s204 + $0x130] sm:$0xf]
      %v297 = vld [vmem:[%s204 + $0x134] sm:$0xf]
      %v298 = vld [vmem:[%s204 + $0x138] sm:$0xf]
      %v299 = vld [vmem:[%s204 + $0x13c] sm:$0xf]
      %v300 = vld [vmem:[%s204 + $0x140] sm:$0xf]
      %v301 = vld [vmem:[%s204 + $0x144] sm:$0xf]
      %v302 = vld [vmem:[%s204 + $0x148] sm:$0xf]
      %v303 = vld [vmem:[%s204 + $0x14c] sm:$0xf]
      %v304 = vld [vmem:[%s204 + $0x150] sm:$0xf]
      %v305 = vld [vmem:[%s204 + $0x154] sm:$0xf]
      %v306 = vld [vmem:[%s204 + $0x158] sm:$0xf]
      %v307 = vld [vmem:[%s204 + $0x15c] sm:$0xf]
      %v308 = vld [vmem:[%s204 + $0x160] sm:$0xf]
      %v309 = vld [vmem:[%s204 + $0x164] sm:$0xf]
      %v310 = vld [vmem:[%s204 + $0x168] sm:$0xf]
      %v311 = vld [vmem:[%s204 + $0x16c] sm:$0xf]
      %v312 = vld [vmem:[%s204 + $0x170] sm:$0xf]
      %v313 = vld [vmem:[%s204 + $0x174] sm:$0xf]
      %v314 = vld [vmem:[%s204 + $0x178] sm:$0xf]
      %v315 = vld [vmem:[%s204 + $0x17c] sm:$0xf]
      %v316 = vld [vmem:[%s204 + $0x180] sm:$0xf]
      %v317 = vld [vmem:[%s204 + $0x184] sm:$0xf]
      %v318 = vld [vmem:[%s204 + $0x188] sm:$0xf]
      %v319 = vld [vmem:[%s204 + $0x18c] sm:$0xf]
      %v320 = vld [vmem:[%s204 + $0x190] sm:$0xf]
      %v321 = vld [vmem:[%s204 + $0x194] sm:$0xf]
      %v322 = vld [vmem:[%s204 + $0x198] sm:$0xf]
      %v323 = vld [vmem:[%s204 + $0x19c] sm:$0xf]
      %v324 = vld [vmem:[%s204 + $0x1a0] sm:$0xf]
      %v325 = vld [vmem:[%s204 + $0x1a4] sm:$0xf]
      %v326 = vld [vmem:[%s204 + $0x1a8] sm:$0xf]
      %v327 = vld [vmem:[%s204 + $0x1ac] sm:$0xf]
      %v328 = vld [vmem:[%s204 + $0x1b0] sm:$0xf]
      %v329 = vld [vmem:[%s204 + $0x1b4] sm:$0xf]
      %v330 = vld [vmem:[%s204 + $0x1b8] sm:$0xf]
      %v331 = vld [vmem:[%s204 + $0x1bc] sm:$0xf]
      %v332 = vld [vmem:[%s204 + $0x1c0] sm:$0xf]
      %v333 = vld [vmem:[%s204 + $0x1c4] sm:$0xf]
      %v334 = vld [vmem:[%s204 + $0x1c8] sm:$0xf]
      %v335 = vld [vmem:[%s204 + $0x1cc] sm:$0xf]
      %v336 = vld [vmem:[%s204 + $0x1d0] sm:$0xf]
      %v337 = vld [vmem:[%s204 + $0x1d4] sm:$0xf]
      %v338 = vld [vmem:[%s204 + $0x1d8] sm:$0xf]
      %v339 = vld [vmem:[%s204 + $0x1dc] sm:$0xf]
      %v340 = vld [vmem:[%s204 + $0x1e0] sm:$0xf]
      %v341 = vld [vmem:[%s204 + $0x1e4] sm:$0xf]
      %v342 = vld [vmem:[%s204 + $0x1e8] sm:$0xf]
      %v343 = vld [vmem:[%s204 + $0x1ec] sm:$0xf]
      %v344 = vld [vmem:[%s204 + $0x1f0] sm:$0xf]
      %v345 = vld [vmem:[%s204 + $0x1f4] sm:$0xf]
      %v346 = vld [vmem:[%s204 + $0x1f8] sm:$0xf]
      %v347 = vld [vmem:[%s204 + $0x1fc] sm:$0xf]
      %v348 = vld [vmem:[%s207] sm:$0x1]
      %v349 = vld [vmem:[%s210] sm:$0x1]
      %v351 = vperm.slane %v349, 0
      %v481 = vunpack.c.l.b16 %v220
      %v482 = vunpack.c.l.b16 %v221
      %v483 = vunpack.c.l.b16 %v222
      %v484 = vunpack.c.l.b16 %v223
      %v485 = vunpack.c.l.b16 %v224
      %v486 = vunpack.c.l.b16 %v225
      %v487 = vunpack.c.l.b16 %v226
      %v488 = vunpack.c.l.b16 %v227
      %v489 = vunpack.c.l.b16 %v228
      %v490 = vunpack.c.l.b16 %v229
      %v491 = vunpack.c.l.b16 %v230
      %v492 = vunpack.c.l.b16 %v231
      %v493 = vunpack.c.l.b16 %v232
      %v494 = vunpack.c.l.b16 %v233
      %v495 = vunpack.c.l.b16 %v234
      %v496 = vunpack.c.l.b16 %v235
      %v497 = vunpack.c.l.b16 %v236
      %v498 = vunpack.c.l.b16 %v237
      %v499 = vunpack.c.l.b16 %v238
      %v500 = vunpack.c.l.b16 %v239
      %v501 = vunpack.c.l.b16 %v240
      %v502 = vunpack.c.l.b16 %v241
      %v503 = vunpack.c.l.b16 %v242
      %v504 = vunpack.c.l.b16 %v243
      %v505 = vunpack.c.l.b16 %v244
      %v506 = vunpack.c.l.b16 %v245
      %v507 = vunpack.c.l.b16 %v246
      %v508 = vunpack.c.l.b16 %v247
      %v509 = vunpack.c.l.b16 %v248
      %v510 = vunpack.c.l.b16 %v249
      %v511 = vunpack.c.l.b16 %v250
      %v512 = vunpack.c.l.b16 %v251
      %v513 = vunpack.c.l.b16 %v252
      %v514 = vunpack.c.l.b16 %v253
      %v515 = vunpack.c.l.b16 %v254
      %v516 = vunpack.c.l.b16 %v255
      %v517 = vunpack.c.l.b16 %v256
      %v518 = vunpack.c.l.b16 %v257
      %v519 = vunpack.c.l.b16 %v258
      %v520 = vunpack.c.l.b16 %v259
      %v521 = vunpack.c.l.b16 %v260
      %v522 = vunpack.c.l.b16 %v261
      %v523 = vunpack.c.l.b16 %v262
      %v524 = vunpack.c.l.b16 %v263
      %v525 = vunpack.c.l.b16 %v264
      %v526 = vunpack.c.l.b16 %v265
      %v527 = vunpack.c.l.b16 %v266
      %v528 = vunpack.c.l.b16 %v267
      %v529 = vunpack.c.l.b16 %v268
      %v530 = vunpack.c.l.b16 %v269
      %v531 = vunpack.c.l.b16 %v270
      %v532 = vunpack.c.l.b16 %v271
      %v533 = vunpack.c.l.b16 %v272
      %v534 = vunpack.c.l.b16 %v273
      %v535 = vunpack.c.l.b16 %v274
      %v536 = vunpack.c.l.b16 %v275
      %v537 = vunpack.c.l.b16 %v276
      %v538 = vunpack.c.l.b16 %v277
      %v539 = vunpack.c.l.b16 %v278
      %v540 = vunpack.c.l.b16 %v279
      %v541 = vunpack.c.l.b16 %v280
      %v542 = vunpack.c.l.b16 %v281
      %v543 = vunpack.c.l.b16 %v282
      %v544 = vunpack.c.l.b16 %v283
      %v545 = vunpack.c.l.b16 %v284
      %v546 = vunpack.c.l.b16 %v285
      %v547 = vunpack.c.l.b16 %v286
      %v548 = vunpack.c.l.b16 %v287
      %v549 = vunpack.c.l.b16 %v288
      %v550 = vunpack.c.l.b16 %v289
      %v551 = vunpack.c.l.b16 %v290
      %v552 = vunpack.c.l.b16 %v291
      %v553 = vunpack.c.l.b16 %v292
      %v554 = vunpack.c.l.b16 %v293
      %v555 = vunpack.c.l.b16 %v294
      %v556 = vunpack.c.l.b16 %v295
      %v557 = vunpack.c.l.b16 %v296
      %v558 = vunpack.c.l.b16 %v297
      %v559 = vunpack.c.l.b16 %v298
      %v560 = vunpack.c.l.b16 %v299
      %v561 = vunpack.c.l.b16 %v300
      %v562 = vunpack.c.l.b16 %v301
      %v563 = vunpack.c.l.b16 %v302
      %v564 = vunpack.c.l.b16 %v303
      %v565 = vunpack.c.l.b16 %v304
      %v566 = vunpack.c.l.b16 %v305
      %v567 = vunpack.c.l.b16 %v306
      %v568 = vunpack.c.l.b16 %v307
      %v569 = vunpack.c.l.b16 %v308
      %v570 = vunpack.c.l.b16 %v309
      %v571 = vunpack.c.l.b16 %v310
      %v572 = vunpack.c.l.b16 %v311
      %v573 = vunpack.c.l.b16 %v312
      %v574 = vunpack.c.l.b16 %v313
      %v575 = vunpack.c.l.b16 %v314
      %v576 = vunpack.c.l.b16 %v315
      %v577 = vunpack.c.l.b16 %v316
      %v578 = vunpack.c.l.b16 %v317
      %v579 = vunpack.c.l.b16 %v318
      %v580 = vunpack.c.l.b16 %v319
      %v581 = vunpack.c.l.b16 %v320
      %v582 = vunpack.c.l.b16 %v321
      %v583 = vunpack.c.l.b16 %v322
      %v584 = vunpack.c.l.b16 %v323
      %v585 = vunpack.c.l.b16 %v324
      %v586 = vunpack.c.l.b16 %v325
      %v587 = vunpack.c.l.b16 %v326
      %v588 = vunpack.c.l.b16 %v327
      %v589 = vunpack.c.l.b16 %v328
      %v590 = vunpack.c.l.b16 %v329
      %v591 = vunpack.c.l.b16 %v330
      %v592 = vunpack.c.l.b16 %v331
      %v593 = vunpack.c.l.b16 %v332
      %v594 = vunpack.c.l.b16 %v333
      %v595 = vunpack.c.l.b16 %v334
      %v596 = vunpack.c.l.b16 %v335
      %v597 = vunpack.c.l.b16 %v336
      %v598 = vunpack.c.l.b16 %v337
      %v599 = vunpack.c.l.b16 %v338
      %v600 = vunpack.c.l.b16 %v339
      %v601 = vunpack.c.l.b16 %v340
      %v602 = vunpack.c.l.b16 %v341
      %v603 = vunpack.c.l.b16 %v342
      %v604 = vunpack.c.l.b16 %v343
      %v605 = vunpack.c.l.b16 %v344
      %v606 = vunpack.c.l.b16 %v345
      %v607 = vunpack.c.l.b16 %v346
      %v608 = vunpack.c.l.b16 %v347
      %v609 = vpack.c.b16 %v482, %v481
      %v610 = vpack.c.b16 %v484, %v483
      %v611 = vpack.c.b16 %v486, %v485
      %v612 = vpack.c.b16 %v488, %v487
      %v613 = vpack.c.b16 %v490, %v489
      %v614 = vpack.c.b16 %v492, %v491
      %v615 = vpack.c.b16 %v494, %v493
      %v616 = vpack.c.b16 %v496, %v495
      %v617 = vpack.c.b16 %v498, %v497
      %v618 = vpack.c.b16 %v500, %v499
      %v619 = vpack.c.b16 %v502, %v501
      %v620 = vpack.c.b16 %v504, %v503
      %v621 = vpack.c.b16 %v506, %v505
      %v622 = vpack.c.b16 %v508, %v507
      %v623 = vpack.c.b16 %v510, %v509
      %v624 = vpack.c.b16 %v512, %v511
      %v625 = vpack.c.b16 %v514, %v513
      %v626 = vpack.c.b16 %v516, %v515
      %v627 = vpack.c.b16 %v518, %v517
      %v628 = vpack.c.b16 %v520, %v519
      %v629 = vpack.c.b16 %v522, %v521
      %v630 = vpack.c.b16 %v524, %v523
      %v631 = vpack.c.b16 %v526, %v525
      %v632 = vpack.c.b16 %v528, %v527
      %v633 = vpack.c.b16 %v530, %v529
      %v634 = vpack.c.b16 %v532, %v531
      %v635 = vpack.c.b16 %v534, %v533
      %v636 = vpack.c.b16 %v536, %v535
      %v637 = vpack.c.b16 %v538, %v537
      %v638 = vpack.c.b16 %v540, %v539
      %v639 = vpack.c.b16 %v542, %v541
      %v640 = vpack.c.b16 %v544, %v543
      %v641 = vpack.c.b16 %v546, %v545
      %v642 = vpack.c.b16 %v548, %v547
      %v643 = vpack.c.b16 %v550, %v549
      %v644 = vpack.c.b16 %v552, %v551
      %v645 = vpack.c.b16 %v554, %v553
      %v646 = vpack.c.b16 %v556, %v555
      %v647 = vpack.c.b16 %v558, %v557
      %v648 = vpack.c.b16 %v560, %v559
      %v649 = vpack.c.b16 %v562, %v561
      %v650 = vpack.c.b16 %v564, %v563
      %v651 = vpack.c.b16 %v566, %v565
      %v652 = vpack.c.b16 %v568, %v567
      %v653 = vpack.c.b16 %v570, %v569
      %v654 = vpack.c.b16 %v572, %v571
      %v655 = vpack.c.b16 %v574, %v573
      %v656 = vpack.c.b16 %v576, %v575
      %v657 = vpack.c.b16 %v578, %v577
      %v658 = vpack.c.b16 %v580, %v579
      %v659 = vpack.c.b16 %v582, %v581
      %v660 = vpack.c.b16 %v584, %v583
      %v661 = vpack.c.b16 %v586, %v585
      %v662 = vpack.c.b16 %v588, %v587
      %v663 = vpack.c.b16 %v590, %v589
      %v664 = vpack.c.b16 %v592, %v591
      %v665 = vpack.c.b16 %v594, %v593
      %v666 = vpack.c.b16 %v596, %v595
      %v667 = vpack.c.b16 %v598, %v597
      %v668 = vpack.c.b16 %v600, %v599
      %v669 = vpack.c.b16 %v602, %v601
      %v670 = vpack.c.b16 %v604, %v603
      %v671 = vpack.c.b16 %v606, %v605
      %v672 = vpack.c.b16 %v608, %v607
      %vm673 = vcmask 15360
      %v675 = vsel %vm673, %v609, 0
      %v678 = vsel %vm673, %v610, 0
      %v681 = vsel %vm673, %v611, 0
      %v684 = vsel %vm673, %v612, 0
      %v687 = vsel %vm673, %v613, 0
      %v690 = vsel %vm673, %v614, 0
      %v693 = vsel %vm673, %v615, 0
      %v696 = vsel %vm673, %v616, 0
      %v699 = vsel %vm673, %v617, 0
      %v702 = vsel %vm673, %v618, 0
      %v705 = vsel %vm673, %v619, 0
      %v708 = vsel %vm673, %v620, 0
      %v711 = vsel %vm673, %v621, 0
      %v714 = vsel %vm673, %v622, 0
      %v717 = vsel %vm673, %v623, 0
      %v720 = vsel %vm673, %v624, 0
      %v723 = vsel %vm673, %v625, 0
      %v726 = vsel %vm673, %v626, 0
      %v729 = vsel %vm673, %v627, 0
      %v732 = vsel %vm673, %v628, 0
      %v735 = vsel %vm673, %v629, 0
      %v738 = vsel %vm673, %v630, 0
      %v741 = vsel %vm673, %v631, 0
      %v744 = vsel %vm673, %v632, 0
      %v747 = vsel %vm673, %v633, 0
      %v750 = vsel %vm673, %v634, 0
      %v753 = vsel %vm673, %v635, 0
      %v756 = vsel %vm673, %v636, 0
      %v759 = vsel %vm673, %v637, 0
      %v762 = vsel %vm673, %v638, 0
      %v765 = vsel %vm673, %v639, 0
      %v768 = vsel %vm673, %v640, 0
      %v771 = vsel %vm673, %v641, 0
      %v774 = vsel %vm673, %v642, 0
      %v777 = vsel %vm673, %v643, 0
      %v780 = vsel %vm673, %v644, 0
      %v783 = vsel %vm673, %v645, 0
      %v786 = vsel %vm673, %v646, 0
      %v789 = vsel %vm673, %v647, 0
      %v792 = vsel %vm673, %v648, 0
      %v795 = vsel %vm673, %v649, 0
      %v798 = vsel %vm673, %v650, 0
      %v801 = vsel %vm673, %v651, 0
      %v804 = vsel %vm673, %v652, 0
      %v807 = vsel %vm673, %v653, 0
      %v810 = vsel %vm673, %v654, 0
      %v813 = vsel %vm673, %v655, 0
      %v816 = vsel %vm673, %v656, 0
      %v819 = vsel %vm673, %v657, 0
      %v822 = vsel %vm673, %v658, 0
      %v825 = vsel %vm673, %v659, 0
      %v828 = vsel %vm673, %v660, 0
      %v831 = vsel %vm673, %v661, 0
      %v834 = vsel %vm673, %v662, 0
      %v837 = vsel %vm673, %v663, 0
      %v840 = vsel %vm673, %v664, 0
      %v843 = vsel %vm673, %v665, 0
      %v846 = vsel %vm673, %v666, 0
      %v849 = vsel %vm673, %v667, 0
      %v852 = vsel %vm673, %v668, 0
      %v855 = vsel %vm673, %v669, 0
      %v858 = vsel %vm673, %v670, 0
      %v861 = vsel %vm673, %v671, 0
      %v864 = vsel %vm673, %v672, 0
      %vm866 = vcmask 1040384
      %v868 = vsel %vm866, %v348, 0
      %870 = vmatpush.bf16.msra.mxu0 0
      %871 = vmatpush.bf16.msra.mxu0 0
      %872 = vmatpush.bf16.msra.mxu0 0
      %873 = vmatpush.bf16.msra.mxu0 0
      %874 = vmatpush.bf16.msra.mxu0 0
      %875 = vmatpush.bf16.msra.mxu0 0
      %876 = vmatpush.bf16.msra.mxu0 0
      %877 = vmatpush.bf16.msra.mxu0 %v868
      %878 = vmatmul.bf16.gmra.mxu0 %v675
      %v879 = vpop.f32.mrf.mxu0
      %v880 = vadd.f32 %v351, %v879
      %v881 = vpop.f32.mrf.mxu0
      %v882 = vadd.f32 %v351, %v881
      %883 = vmatmul.bf16.gmra.mxu0 %v678
      %v884 = vpop.f32.mrf.mxu0
      %v885 = vadd.f32 %v351, %v884
      %v886 = vpop.f32.mrf.mxu0
      %v887 = vadd.f32 %v351, %v886
      %888 = vmatmul.bf16.gmra.mxu0 %v681
      %v889 = vpop.f32.mrf.mxu0
      %v890 = vadd.f32 %v351, %v889
      %v891 = vpop.f32.mrf.mxu0
      %v892 = vadd.f32 %v351, %v891
      %893 = vmatmul.bf16.gmra.mxu0 %v684
      %v894 = vpop.f32.mrf.mxu0
      %v895 = vadd.f32 %v351, %v894
      %v896 = vpop.f32.mrf.mxu0
      %v897 = vadd.f32 %v351, %v896
      %898 = vmatmul.bf16.gmra.mxu0 %v687
      %v899 = vpop.f32.mrf.mxu0
      %v900 = vadd.f32 %v351, %v899
      %v901 = vpop.f32.mrf.mxu0
      %v902 = vadd.f32 %v351, %v901
      %903 = vmatmul.bf16.gmra.mxu0 %v690
      %v904 = vpop.f32.mrf.mxu0
      %v905 = vadd.f32 %v351, %v904
      %v906 = vpop.f32.mrf.mxu0
      %v907 = vadd.f32 %v351, %v906
      %908 = vmatmul.bf16.gmra.mxu0 %v693
      %v909 = vpop.f32.mrf.mxu0
      %v910 = vadd.f32 %v351, %v909
      %v911 = vpop.f32.mrf.mxu0
      %v912 = vadd.f32 %v351, %v911
      %913 = vmatmul.bf16.gmra.mxu0 %v696
      %v914 = vpop.f32.mrf.mxu0
      %v915 = vadd.f32 %v351, %v914
      %v916 = vpop.f32.mrf.mxu0
      %v917 = vadd.f32 %v351, %v916
      %918 = vmatmul.bf16.gmra.mxu0 %v699
      %v919 = vpop.f32.mrf.mxu0
      %v920 = vadd.f32 %v351, %v919
      %v921 = vpop.f32.mrf.mxu0
      %v922 = vadd.f32 %v351, %v921
      %923 = vmatmul.bf16.gmra.mxu0 %v702
      %v924 = vpop.f32.mrf.mxu0
      %v925 = vadd.f32 %v351, %v924
      %v926 = vpop.f32.mrf.mxu0
      %v927 = vadd.f32 %v351, %v926
      %928 = vmatmul.bf16.gmra.mxu0 %v705
      %v929 = vpop.f32.mrf.mxu0
      %v930 = vadd.f32 %v351, %v929
      %v931 = vpop.f32.mrf.mxu0
      %v932 = vadd.f32 %v351, %v931
      %933 = vmatmul.bf16.gmra.mxu0 %v708
      %v934 = vpop.f32.mrf.mxu0
      %v935 = vadd.f32 %v351, %v934
      %v936 = vpop.f32.mrf.mxu0
      %v937 = vadd.f32 %v351, %v936
      %938 = vmatmul.bf16.gmra.mxu0 %v711
      %v939 = vpop.f32.mrf.mxu0
      %v940 = vadd.f32 %v351, %v939
      %v941 = vpop.f32.mrf.mxu0
      %v942 = vadd.f32 %v351, %v941
      %943 = vmatmul.bf16.gmra.mxu0 %v714
      %v944 = vpop.f32.mrf.mxu0
      %v945 = vadd.f32 %v351, %v944
      %v946 = vpop.f32.mrf.mxu0
      %v947 = vadd.f32 %v351, %v946
      %948 = vmatmul.bf16.gmra.mxu0 %v717
      %v949 = vpop.f32.mrf.mxu0
      %v950 = vadd.f32 %v351, %v949
      %v951 = vpop.f32.mrf.mxu0
      %v952 = vadd.f32 %v351, %v951
      %953 = vmatmul.bf16.gmra.mxu0 %v720
      %v954 = vpop.f32.mrf.mxu0
      %v955 = vadd.f32 %v351, %v954
      %v956 = vpop.f32.mrf.mxu0
      %v957 = vadd.f32 %v351, %v956
      %958 = vmatmul.bf16.gmra.mxu0 %v723
      %v959 = vpop.f32.mrf.mxu0
      %v960 = vadd.f32 %v351, %v959
      %v961 = vpop.f32.mrf.mxu0
      %v962 = vadd.f32 %v351, %v961
      %963 = vmatmul.bf16.gmra.mxu0 %v726
      %v964 = vpop.f32.mrf.mxu0
      %v965 = vadd.f32 %v351, %v964
      %v966 = vpop.f32.mrf.mxu0
      %v967 = vadd.f32 %v351, %v966
      %968 = vmatmul.bf16.gmra.mxu0 %v729
      %v969 = vpop.f32.mrf.mxu0
      %v970 = vadd.f32 %v351, %v969
      %v971 = vpop.f32.mrf.mxu0
      %v972 = vadd.f32 %v351, %v971
      %973 = vmatmul.bf16.gmra.mxu0 %v732
      %v974 = vpop.f32.mrf.mxu0
      %v975 = vadd.f32 %v351, %v974
      %v976 = vpop.f32.mrf.mxu0
      %v977 = vadd.f32 %v351, %v976
      %978 = vmatmul.bf16.gmra.mxu0 %v735
      %v979 = vpop.f32.mrf.mxu0
      %v980 = vadd.f32 %v351, %v979
      %v981 = vpop.f32.mrf.mxu0
      %v982 = vadd.f32 %v351, %v981
      %983 = vmatmul.bf16.gmra.mxu0 %v738
      %v984 = vpop.f32.mrf.mxu0
      %v985 = vadd.f32 %v351, %v984
      %v986 = vpop.f32.mrf.mxu0
      %v987 = vadd.f32 %v351, %v986
      %988 = vmatmul.bf16.gmra.mxu0 %v741
      %v989 = vpop.f32.mrf.mxu0
      %v990 = vadd.f32 %v351, %v989
      %v991 = vpop.f32.mrf.mxu0
      %v992 = vadd.f32 %v351, %v991
      %993 = vmatmul.bf16.gmra.mxu0 %v744
      %v994 = vpop.f32.mrf.mxu0
      %v995 = vadd.f32 %v351, %v994
      %v996 = vpop.f32.mrf.mxu0
      %v997 = vadd.f32 %v351, %v996
      %998 = vmatmul.bf16.gmra.mxu0 %v747
      %v999 = vpop.f32.mrf.mxu0
      %v1000 = vadd.f32 %v351, %v999
      %v1001 = vpop.f32.mrf.mxu0
      %v1002 = vadd.f32 %v351, %v1001
      %1003 = vmatmul.bf16.gmra.mxu0 %v750
      %v1004 = vpop.f32.mrf.mxu0
      %v1005 = vadd.f32 %v351, %v1004
      %v1006 = vpop.f32.mrf.mxu0
      %v1007 = vadd.f32 %v351, %v1006
      %1008 = vmatmul.bf16.gmra.mxu0 %v753
      %v1009 = vpop.f32.mrf.mxu0
      %v1010 = vadd.f32 %v351, %v1009
      %v1011 = vpop.f32.mrf.mxu0
      %v1012 = vadd.f32 %v351, %v1011
      %1013 = vmatmul.bf16.gmra.mxu0 %v756
      %v1014 = vpop.f32.mrf.mxu0
      %v1015 = vadd.f32 %v351, %v1014
      %v1016 = vpop.f32.mrf.mxu0
      %v1017 = vadd.f32 %v351, %v1016
      %1018 = vmatmul.bf16.gmra.mxu0 %v759
      %v1019 = vpop.f32.mrf.mxu0
      %v1020 = vadd.f32 %v351, %v1019
      %v1021 = vpop.f32.mrf.mxu0
      %v1022 = vadd.f32 %v351, %v1021
      %1023 = vmatmul.bf16.gmra.mxu0 %v762
      %v1024 = vpop.f32.mrf.mxu0
      %v1025 = vadd.f32 %v351, %v1024
      %v1026 = vpop.f32.mrf.mxu0
      %v1027 = vadd.f32 %v351, %v1026
      %1028 = vmatmul.bf16.gmra.mxu0 %v765
      %v1029 = vpop.f32.mrf.mxu0
      %v1030 = vadd.f32 %v351, %v1029
      %v1031 = vpop.f32.mrf.mxu0
      %v1032 = vadd.f32 %v351, %v1031
      %1033 = vmatmul.bf16.gmra.mxu0 %v768
      %v1034 = vpop.f32.mrf.mxu0
      %v1035 = vadd.f32 %v351, %v1034
      %v1036 = vpop.f32.mrf.mxu0
      %v1037 = vadd.f32 %v351, %v1036
      %1038 = vmatmul.bf16.gmra.mxu0 %v771
      %v1039 = vpop.f32.mrf.mxu0
      %v1040 = vadd.f32 %v351, %v1039
      %v1041 = vpop.f32.mrf.mxu0
      %v1042 = vadd.f32 %v351, %v1041
      %1043 = vmatmul.bf16.gmra.mxu0 %v774
      %v1044 = vpop.f32.mrf.mxu0
      %v1045 = vadd.f32 %v351, %v1044
      %v1046 = vpop.f32.mrf.mxu0
      %v1047 = vadd.f32 %v351, %v1046
      %1048 = vmatmul.bf16.gmra.mxu0 %v777
      %v1049 = vpop.f32.mrf.mxu0
      %v1050 = vadd.f32 %v351, %v1049
      %v1051 = vpop.f32.mrf.mxu0
      %v1052 = vadd.f32 %v351, %v1051
      %1053 = vmatmul.bf16.gmra.mxu0 %v780
      %v1054 = vpop.f32.mrf.mxu0
      %v1055 = vadd.f32 %v351, %v1054
      %v1056 = vpop.f32.mrf.mxu0
      %v1057 = vadd.f32 %v351, %v1056
      %1058 = vmatmul.bf16.gmra.mxu0 %v783
      %v1059 = vpop.f32.mrf.mxu0
      %v1060 = vadd.f32 %v351, %v1059
      %v1061 = vpop.f32.mrf.mxu0
      %v1062 = vadd.f32 %v351, %v1061
      %1063 = vmatmul.bf16.gmra.mxu0 %v786
      %v1064 = vpop.f32.mrf.mxu0
      %v1065 = vadd.f32 %v351, %v1064
      %v1066 = vpop.f32.mrf.mxu0
      %v1067 = vadd.f32 %v351, %v1066
      %1068 = vmatmul.bf16.gmra.mxu0 %v789
      %v1069 = vpop.f32.mrf.mxu0
      %v1070 = vadd.f32 %v351, %v1069
      %v1071 = vpop.f32.mrf.mxu0
      %v1072 = vadd.f32 %v351, %v1071
      %1073 = vmatmul.bf16.gmra.mxu0 %v792
      %v1074 = vpop.f32.mrf.mxu0
      %v1075 = vadd.f32 %v351, %v1074
      %v1076 = vpop.f32.mrf.mxu0
      %v1077 = vadd.f32 %v351, %v1076
      %1078 = vmatmul.bf16.gmra.mxu0 %v795
      %v1079 = vpop.f32.mrf.mxu0
      %v1080 = vadd.f32 %v351, %v1079
      %v1081 = vpop.f32.mrf.mxu0
      %v1082 = vadd.f32 %v351, %v1081
      %1083 = vmatmul.bf16.gmra.mxu0 %v798
      %v1084 = vpop.f32.mrf.mxu0
      %v1085 = vadd.f32 %v351, %v1084
      %v1086 = vpop.f32.mrf.mxu0
      %v1087 = vadd.f32 %v351, %v1086
      %1088 = vmatmul.bf16.gmra.mxu0 %v801
      %v1089 = vpop.f32.mrf.mxu0
      %v1090 = vadd.f32 %v351, %v1089
      %v1091 = vpop.f32.mrf.mxu0
      %v1092 = vadd.f32 %v351, %v1091
      %1093 = vmatmul.bf16.gmra.mxu0 %v804
      %v1094 = vpop.f32.mrf.mxu0
      %v1095 = vadd.f32 %v351, %v1094
      %v1096 = vpop.f32.mrf.mxu0
      %v1097 = vadd.f32 %v351, %v1096
      %1098 = vmatmul.bf16.gmra.mxu0 %v807
      %v1099 = vpop.f32.mrf.mxu0
      %v1100 = vadd.f32 %v351, %v1099
      %v1101 = vpop.f32.mrf.mxu0
      %v1102 = vadd.f32 %v351, %v1101
      %1103 = vmatmul.bf16.gmra.mxu0 %v810
      %v1104 = vpop.f32.mrf.mxu0
      %v1105 = vadd.f32 %v351, %v1104
      %v1106 = vpop.f32.mrf.mxu0
      %v1107 = vadd.f32 %v351, %v1106
      %1108 = vmatmul.bf16.gmra.mxu0 %v813
      %v1109 = vpop.f32.mrf.mxu0
      %v1110 = vadd.f32 %v351, %v1109
      %v1111 = vpop.f32.mrf.mxu0
      %v1112 = vadd.f32 %v351, %v1111
      %1113 = vmatmul.bf16.gmra.mxu0 %v816
      %v1114 = vpop.f32.mrf.mxu0
      %v1115 = vadd.f32 %v351, %v1114
      %v1116 = vpop.f32.mrf.mxu0
      %v1117 = vadd.f32 %v351, %v1116
      %1118 = vmatmul.bf16.gmra.mxu0 %v819
      %v1119 = vpop.f32.mrf.mxu0
      %v1120 = vadd.f32 %v351, %v1119
      %v1121 = vpop.f32.mrf.mxu0
      %v1122 = vadd.f32 %v351, %v1121
      %1123 = vmatmul.bf16.gmra.mxu0 %v822
      %v1124 = vpop.f32.mrf.mxu0
      %v1125 = vadd.f32 %v351, %v1124
      %v1126 = vpop.f32.mrf.mxu0
      %v1127 = vadd.f32 %v351, %v1126
      %1128 = vmatmul.bf16.gmra.mxu0 %v825
      %v1129 = vpop.f32.mrf.mxu0
      %v1130 = vadd.f32 %v351, %v1129
      %v1131 = vpop.f32.mrf.mxu0
      %v1132 = vadd.f32 %v351, %v1131
      %1133 = vmatmul.bf16.gmra.mxu0 %v828
      %v1134 = vpop.f32.mrf.mxu0
      %v1135 = vadd.f32 %v351, %v1134
      %v1136 = vpop.f32.mrf.mxu0
      %v1137 = vadd.f32 %v351, %v1136
      %1138 = vmatmul.bf16.gmra.mxu0 %v831
      %v1139 = vpop.f32.mrf.mxu0
      %v1140 = vadd.f32 %v351, %v1139
      %v1141 = vpop.f32.mrf.mxu0
      %v1142 = vadd.f32 %v351, %v1141
      %1143 = vmatmul.bf16.gmra.mxu0 %v834
      %v1144 = vpop.f32.mrf.mxu0
      %v1145 = vadd.f32 %v351, %v1144
      %v1146 = vpop.f32.mrf.mxu0
      %v1147 = vadd.f32 %v351, %v1146
      %1148 = vmatmul.bf16.gmra.mxu0 %v837
      %v1149 = vpop.f32.mrf.mxu0
      %v1150 = vadd.f32 %v351, %v1149
      %v1151 = vpop.f32.mrf.mxu0
      %v1152 = vadd.f32 %v351, %v1151
      %1153 = vmatmul.bf16.gmra.mxu0 %v840
      %v1154 = vpop.f32.mrf.mxu0
      %v1155 = vadd.f32 %v351, %v1154
      %v1156 = vpop.f32.mrf.mxu0
      %v1157 = vadd.f32 %v351, %v1156
      %1158 = vmatmul.bf16.gmra.mxu0 %v843
      %v1159 = vpop.f32.mrf.mxu0
      %v1160 = vadd.f32 %v351, %v1159
      %v1161 = vpop.f32.mrf.mxu0
      %v1162 = vadd.f32 %v351, %v1161
      %1163 = vmatmul.bf16.gmra.mxu0 %v846
      %v1164 = vpop.f32.mrf.mxu0
      %v1165 = vadd.f32 %v351, %v1164
      %v1166 = vpop.f32.mrf.mxu0
      %v1167 = vadd.f32 %v351, %v1166
      %1168 = vmatmul.bf16.gmra.mxu0 %v849
      %v1169 = vpop.f32.mrf.mxu0
      %v1170 = vadd.f32 %v351, %v1169
      %v1171 = vpop.f32.mrf.mxu0
      %v1172 = vadd.f32 %v351, %v1171
      %1173 = vmatmul.bf16.gmra.mxu0 %v852
      %v1174 = vpop.f32.mrf.mxu0
      %v1175 = vadd.f32 %v351, %v1174
      %v1176 = vpop.f32.mrf.mxu0
      %v1177 = vadd.f32 %v351, %v1176
      %1178 = vmatmul.bf16.gmra.mxu0 %v855
      %v1179 = vpop.f32.mrf.mxu0
      %v1180 = vadd.f32 %v351, %v1179
      %v1181 = vpop.f32.mrf.mxu0
      %v1182 = vadd.f32 %v351, %v1181
      %1183 = vmatmul.bf16.gmra.mxu0 %v858
      %v1184 = vpop.f32.mrf.mxu0
      %v1185 = vadd.f32 %v351, %v1184
      %v1186 = vpop.f32.mrf.mxu0
      %v1187 = vadd.f32 %v351, %v1186
      %1188 = vmatmul.bf16.gmra.mxu0 %v861
      %v1189 = vpop.f32.mrf.mxu0
      %v1190 = vadd.f32 %v351, %v1189
      %v1191 = vpop.f32.mrf.mxu0
      %v1192 = vadd.f32 %v351, %v1191
      %1193 = vmatmul.bf16.gmra.mxu0 %v864
      %v1194 = vpop.f32.mrf.mxu0
      %v1195 = vadd.f32 %v351, %v1194
      %v1196 = vpop.f32.mrf.mxu0
      %v1197 = vadd.f32 %v351, %v1196
      %1198 = vdwg.mxu0
      %v1199 = vpack.c.bf16 %v880, %v880
      %v1200 = vpack.c.bf16 %v882, %v882
      %v1201 = vpack.c.bf16 %v885, %v885
      %v1202 = vpack.c.bf16 %v887, %v887
      %v1203 = vpack.c.bf16 %v890, %v890
      %v1204 = vpack.c.bf16 %v892, %v892
      %v1205 = vpack.c.bf16 %v895, %v895
      %v1206 = vpack.c.bf16 %v897, %v897
      %v1207 = vpack.c.bf16 %v900, %v900
      %v1208 = vpack.c.bf16 %v902, %v902
      %v1209 = vpack.c.bf16 %v905, %v905
      %v1210 = vpack.c.bf16 %v907, %v907
      %v1211 = vpack.c.bf16 %v910, %v910
      %v1212 = vpack.c.bf16 %v912, %v912
      %v1213 = vpack.c.bf16 %v915, %v915
      %v1214 = vpack.c.bf16 %v917, %v917
      %v1215 = vpack.c.bf16 %v920, %v920
      %v1216 = vpack.c.bf16 %v922, %v922
      %v1217 = vpack.c.bf16 %v925, %v925
      %v1218 = vpack.c.bf16 %v927, %v927
      %v1219 = vpack.c.bf16 %v930, %v930
      %v1220 = vpack.c.bf16 %v932, %v932
      %v1221 = vpack.c.bf16 %v935, %v935
      %v1222 = vpack.c.bf16 %v937, %v937
      %v1223 = vpack.c.bf16 %v940, %v940
      %v1224 = vpack.c.bf16 %v942, %v942
      %v1225 = vpack.c.bf16 %v945, %v945
      %v1226 = vpack.c.bf16 %v947, %v947
      %v1227 = vpack.c.bf16 %v950, %v950
      %v1228 = vpack.c.bf16 %v952, %v952
      %v1229 = vpack.c.bf16 %v955, %v955
      %v1230 = vpack.c.bf16 %v957, %v957
      %v1231 = vpack.c.bf16 %v960, %v960
      %v1232 = vpack.c.bf16 %v962, %v962
      %v1233 = vpack.c.bf16 %v965, %v965
      %v1234 = vpack.c.bf16 %v967, %v967
      %v1235 = vpack.c.bf16 %v970, %v970
      %v1236 = vpack.c.bf16 %v972, %v972
      %v1237 = vpack.c.bf16 %v975, %v975
      %v1238 = vpack.c.bf16 %v977, %v977
      %v1239 = vpack.c.bf16 %v980, %v980
      %v1240 = vpack.c.bf16 %v982, %v982
      %v1241 = vpack.c.bf16 %v985, %v985
      %v1242 = vpack.c.bf16 %v987, %v987
      %v1243 = vpack.c.bf16 %v990, %v990
      %v1244 = vpack.c.bf16 %v992, %v992
      %v1245 = vpack.c.bf16 %v995, %v995
      %v1246 = vpack.c.bf16 %v997, %v997
      %v1247 = vpack.c.bf16 %v1000, %v1000
      %v1248 = vpack.c.bf16 %v1002, %v1002
      %v1249 = vpack.c.bf16 %v1005, %v1005
      %v1250 = vpack.c.bf16 %v1007, %v1007
      %v1251 = vpack.c.bf16 %v1010, %v1010
      %v1252 = vpack.c.bf16 %v1012, %v1012
      %v1253 = vpack.c.bf16 %v1015, %v1015
      %v1254 = vpack.c.bf16 %v1017, %v1017
      %v1255 = vpack.c.bf16 %v1020, %v1020
      %v1256 = vpack.c.bf16 %v1022, %v1022
      %v1257 = vpack.c.bf16 %v1025, %v1025
      %v1258 = vpack.c.bf16 %v1027, %v1027
      %v1259 = vpack.c.bf16 %v1030, %v1030
      %v1260 = vpack.c.bf16 %v1032, %v1032
      %v1261 = vpack.c.bf16 %v1035, %v1035
      %v1262 = vpack.c.bf16 %v1037, %v1037
      %v1263 = vpack.c.bf16 %v1040, %v1040
      %v1264 = vpack.c.bf16 %v1042, %v1042
      %v1265 = vpack.c.bf16 %v1045, %v1045
      %v1266 = vpack.c.bf16 %v1047, %v1047
      %v1267 = vpack.c.bf16 %v1050, %v1050
      %v1268 = vpack.c.bf16 %v1052, %v1052
      %v1269 = vpack.c.bf16 %v1055, %v1055
      %v1270 = vpack.c.bf16 %v1057, %v1057
      %v1271 = vpack.c.bf16 %v1060, %v1060
      %v1272 = vpack.c.bf16 %v1062, %v1062
      %v1273 = vpack.c.bf16 %v1065, %v1065
      %v1274 = vpack.c.bf16 %v1067, %v1067
      %v1275 = vpack.c.bf16 %v1070, %v1070
      %v1276 = vpack.c.bf16 %v1072, %v1072
      %v1277 = vpack.c.bf16 %v1075, %v1075
      %v1278 = vpack.c.bf16 %v1077, %v1077
      %v1279 = vpack.c.bf16 %v1080, %v1080
      %v1280 = vpack.c.bf16 %v1082, %v1082
      %v1281 = vpack.c.bf16 %v1085, %v1085
      %v1282 = vpack.c.bf16 %v1087, %v1087
      %v1283 = vpack.c.bf16 %v1090, %v1090
      %v1284 = vpack.c.bf16 %v1092, %v1092
      %v1285 = vpack.c.bf16 %v1095, %v1095
      %v1286 = vpack.c.bf16 %v1097, %v1097
      %v1287 = vpack.c.bf16 %v1100, %v1100
      %v1288 = vpack.c.bf16 %v1102, %v1102
      %v1289 = vpack.c.bf16 %v1105, %v1105
      %v1290 = vpack.c.bf16 %v1107, %v1107
      %v1291 = vpack.c.bf16 %v1110, %v1110
      %v1292 = vpack.c.bf16 %v1112, %v1112
      %v1293 = vpack.c.bf16 %v1115, %v1115
      %v1294 = vpack.c.bf16 %v1117, %v1117
      %v1295 = vpack.c.bf16 %v1120, %v1120
      %v1296 = vpack.c.bf16 %v1122, %v1122
      %v1297 = vpack.c.bf16 %v1125, %v1125
      %v1298 = vpack.c.bf16 %v1127, %v1127
      %v1299 = vpack.c.bf16 %v1130, %v1130
      %v1300 = vpack.c.bf16 %v1132, %v1132
      %v1301 = vpack.c.bf16 %v1135, %v1135
      %v1302 = vpack.c.bf16 %v1137, %v1137
      %v1303 = vpack.c.bf16 %v1140, %v1140
      %v1304 = vpack.c.bf16 %v1142, %v1142
      %v1305 = vpack.c.bf16 %v1145, %v1145
      %v1306 = vpack.c.bf16 %v1147, %v1147
      %v1307 = vpack.c.bf16 %v1150, %v1150
      %v1308 = vpack.c.bf16 %v1152, %v1152
      %v1309 = vpack.c.bf16 %v1155, %v1155
      %v1310 = vpack.c.bf16 %v1157, %v1157
      %v1311 = vpack.c.bf16 %v1160, %v1160
      %v1312 = vpack.c.bf16 %v1162, %v1162
      %v1313 = vpack.c.bf16 %v1165, %v1165
      %v1314 = vpack.c.bf16 %v1167, %v1167
      %v1315 = vpack.c.bf16 %v1170, %v1170
      %v1316 = vpack.c.bf16 %v1172, %v1172
      %v1317 = vpack.c.bf16 %v1175, %v1175
      %v1318 = vpack.c.bf16 %v1177, %v1177
      %v1319 = vpack.c.bf16 %v1180, %v1180
      %v1320 = vpack.c.bf16 %v1182, %v1182
      %v1321 = vpack.c.bf16 %v1185, %v1185
      %v1322 = vpack.c.bf16 %v1187, %v1187
      %v1323 = vpack.c.bf16 %v1190, %v1190
      %v1324 = vpack.c.bf16 %v1192, %v1192
      %v1325 = vpack.c.bf16 %v1195, %v1195
      %v1326 = vpack.c.bf16 %v1197, %v1197
      %vm1327 = vcmask 257024
      %1328 = vst.msk [vmem:[%s218] sm:$0xf] %vm1327, %v1199
      %1329 = vst.msk [vmem:[%s218 + $0x4] sm:$0xf] %vm1327, %v1200
      %1330 = vst.msk [vmem:[%s218 + $0x8] sm:$0xf] %vm1327, %v1201
      %1331 = vst.msk [vmem:[%s218 + $0xc] sm:$0xf] %vm1327, %v1202
      %1332 = vst.msk [vmem:[%s218 + $0x10] sm:$0xf] %vm1327, %v1203
      %1333 = vst.msk [vmem:[%s218 + $0x14] sm:$0xf] %vm1327, %v1204
      %1334 = vst.msk [vmem:[%s218 + $0x18] sm:$0xf] %vm1327, %v1205
      %1335 = vst.msk [vmem:[%s218 + $0x1c] sm:$0xf] %vm1327, %v1206
      %1336 = vst.msk [vmem:[%s218 + $0x20] sm:$0xf] %vm1327, %v1207
      %1337 = vst.msk [vmem:[%s218 + $0x24] sm:$0xf] %vm1327, %v1208
      %1338 = vst.msk [vmem:[%s218 + $0x28] sm:$0xf] %vm1327, %v1209
      %1339 = vst.msk [vmem:[%s218 + $0x2c] sm:$0xf] %vm1327, %v1210
      %1340 = vst.msk [vmem:[%s218 + $0x30] sm:$0xf] %vm1327, %v1211
      %1341 = vst.msk [vmem:[%s218 + $0x34] sm:$0xf] %vm1327, %v1212
      %1342 = vst.msk [vmem:[%s218 + $0x38] sm:$0xf] %vm1327, %v1213
      %1343 = vst.msk [vmem:[%s218 + $0x3c] sm:$0xf] %vm1327, %v1214
      %1344 = vst.msk [vmem:[%s218 + $0x40] sm:$0xf] %vm1327, %v1215
      %1345 = vst.msk [vmem:[%s218 + $0x44] sm:$0xf] %vm1327, %v1216
      %1346 = vst.msk [vmem:[%s218 + $0x48] sm:$0xf] %vm1327, %v1217
      %1347 = vst.msk [vmem:[%s218 + $0x4c] sm:$0xf] %vm1327, %v1218
      %1348 = vst.msk [vmem:[%s218 + $0x50] sm:$0xf] %vm1327, %v1219
      %1349 = vst.msk [vmem:[%s218 + $0x54] sm:$0xf] %vm1327, %v1220
      %1350 = vst.msk [vmem:[%s218 + $0x58] sm:$0xf] %vm1327, %v1221
      %1351 = vst.msk [vmem:[%s218 + $0x5c] sm:$0xf] %vm1327, %v1222
      %1352 = vst.msk [vmem:[%s218 + $0x60] sm:$0xf] %vm1327, %v1223
      %1353 = vst.msk [vmem:[%s218 + $0x64] sm:$0xf] %vm1327, %v1224
      %1354 = vst.msk [vmem:[%s218 + $0x68] sm:$0xf] %vm1327, %v1225
      %1355 = vst.msk [vmem:[%s218 + $0x6c] sm:$0xf] %vm1327, %v1226
      %1356 = vst.msk [vmem:[%s218 + $0x70] sm:$0xf] %vm1327, %v1227
      %1357 = vst.msk [vmem:[%s218 + $0x74] sm:$0xf] %vm1327, %v1228
      %1358 = vst.msk [vmem:[%s218 + $0x78] sm:$0xf] %vm1327, %v1229
      %1359 = vst.msk [vmem:[%s218 + $0x7c] sm:$0xf] %vm1327, %v1230
      %1360 = vst.msk [vmem:[%s218 + $0x80] sm:$0xf] %vm1327, %v1231
      %1361 = vst.msk [vmem:[%s218 + $0x84] sm:$0xf] %vm1327, %v1232
      %1362 = vst.msk [vmem:[%s218 + $0x88] sm:$0xf] %vm1327, %v1233
      %1363 = vst.msk [vmem:[%s218 + $0x8c] sm:$0xf] %vm1327, %v1234
      %1364 = vst.msk [vmem:[%s218 + $0x90] sm:$0xf] %vm1327, %v1235
      %1365 = vst.msk [vmem:[%s218 + $0x94] sm:$0xf] %vm1327, %v1236
      %1366 = vst.msk [vmem:[%s218 + $0x98] sm:$0xf] %vm1327, %v1237
      %1367 = vst.msk [vmem:[%s218 + $0x9c] sm:$0xf] %vm1327, %v1238
      %1368 = vst.msk [vmem:[%s218 + $0xa0] sm:$0xf] %vm1327, %v1239
      %1369 = vst.msk [vmem:[%s218 + $0xa4] sm:$0xf] %vm1327, %v1240
      %1370 = vst.msk [vmem:[%s218 + $0xa8] sm:$0xf] %vm1327, %v1241
      %1371 = vst.msk [vmem:[%s218 + $0xac] sm:$0xf] %vm1327, %v1242
      %1372 = vst.msk [vmem:[%s218 + $0xb0] sm:$0xf] %vm1327, %v1243
      %1373 = vst.msk [vmem:[%s218 + $0xb4] sm:$0xf] %vm1327, %v1244
      %1374 = vst.msk [vmem:[%s218 + $0xb8] sm:$0xf] %vm1327, %v1245
      %1375 = vst.msk [vmem:[%s218 + $0xbc] sm:$0xf] %vm1327, %v1246
      %1376 = vst.msk [vmem:[%s218 + $0xc0] sm:$0xf] %vm1327, %v1247
      %1377 = vst.msk [vmem:[%s218 + $0xc4] sm:$0xf] %vm1327, %v1248
      %1378 = vst.msk [vmem:[%s218 + $0xc8] sm:$0xf] %vm1327, %v1249
      %1379 = vst.msk [vmem:[%s218 + $0xcc] sm:$0xf] %vm1327, %v1250
      %1380 = vst.msk [vmem:[%s218 + $0xd0] sm:$0xf] %vm1327, %v1251
      %1381 = vst.msk [vmem:[%s218 + $0xd4] sm:$0xf] %vm1327, %v1252
      %1382 = vst.msk [vmem:[%s218 + $0xd8] sm:$0xf] %vm1327, %v1253
      %1383 = vst.msk [vmem:[%s218 + $0xdc] sm:$0xf] %vm1327, %v1254
      %1384 = vst.msk [vmem:[%s218 + $0xe0] sm:$0xf] %vm1327, %v1255
      %1385 = vst.msk [vmem:[%s218 + $0xe4] sm:$0xf] %vm1327, %v1256
      %1386 = vst.msk [vmem:[%s218 + $0xe8] sm:$0xf] %vm1327, %v1257
      %1387 = vst.msk [vmem:[%s218 + $0xec] sm:$0xf] %vm1327, %v1258
      %1388 = vst.msk [vmem:[%s218 + $0xf0] sm:$0xf] %vm1327, %v1259
      %1389 = vst.msk [vmem:[%s218 + $0xf4] sm:$0xf] %vm1327, %v1260
      %1390 = vst.msk [vmem:[%s218 + $0xf8] sm:$0xf] %vm1327, %v1261
      %1391 = vst.msk [vmem:[%s218 + $0xfc] sm:$0xf] %vm1327, %v1262
      %1392 = vst.msk [vmem:[%s218 + $0x100] sm:$0xf] %vm1327, %v1263
      %1393 = vst.msk [vmem:[%s218 + $0x104] sm:$0xf] %vm1327, %v1264
      %1394 = vst.msk [vmem:[%s218 + $0x108] sm:$0xf] %vm1327, %v1265
      %1395 = vst.msk [vmem:[%s218 + $0x10c] sm:$0xf] %vm1327, %v1266
      %1396 = vst.msk [vmem:[%s218 + $0x110] sm:$0xf] %vm1327, %v1267
      %1397 = vst.msk [vmem:[%s218 + $0x114] sm:$0xf] %vm1327, %v1268
      %1398 = vst.msk [vmem:[%s218 + $0x118] sm:$0xf] %vm1327, %v1269
      %1399 = vst.msk [vmem:[%s218 + $0x11c] sm:$0xf] %vm1327, %v1270
      %1400 = vst.msk [vmem:[%s218 + $0x120] sm:$0xf] %vm1327, %v1271
      %1401 = vst.msk [vmem:[%s218 + $0x124] sm:$0xf] %vm1327, %v1272
      %1402 = vst.msk [vmem:[%s218 + $0x128] sm:$0xf] %vm1327, %v1273
      %1403 = vst.msk [vmem:[%s218 + $0x12c] sm:$0xf] %vm1327, %v1274
      %1404 = vst.msk [vmem:[%s218 + $0x130] sm:$0xf] %vm1327, %v1275
      %1405 = vst.msk [vmem:[%s218 + $0x134] sm:$0xf] %vm1327, %v1276
      %1406 = vst.msk [vmem:[%s218 + $0x138] sm:$0xf] %vm1327, %v1277
      %1407 = vst.msk [vmem:[%s218 + $0x13c] sm:$0xf] %vm1327, %v1278
      %1408 = vst.msk [vmem:[%s218 + $0x140] sm:$0xf] %vm1327, %v1279
      %1409 = vst.msk [vmem:[%s218 + $0x144] sm:$0xf] %vm1327, %v1280
      %1410 = vst.msk [vmem:[%s218 + $0x148] sm:$0xf] %vm1327, %v1281
      %1411 = vst.msk [vmem:[%s218 + $0x14c] sm:$0xf] %vm1327, %v1282
      %1412 = vst.msk [vmem:[%s218 + $0x150] sm:$0xf] %vm1327, %v1283
      %1413 = vst.msk [vmem:[%s218 + $0x154] sm:$0xf] %vm1327, %v1284
      %1414 = vst.msk [vmem:[%s218 + $0x158] sm:$0xf] %vm1327, %v1285
      %1415 = vst.msk [vmem:[%s218 + $0x15c] sm:$0xf] %vm1327, %v1286
      %1416 = vst.msk [vmem:[%s218 + $0x160] sm:$0xf] %vm1327, %v1287
      %1417 = vst.msk [vmem:[%s218 + $0x164] sm:$0xf] %vm1327, %v1288
      %1418 = vst.msk [vmem:[%s218 + $0x168] sm:$0xf] %vm1327, %v1289
      %1419 = vst.msk [vmem:[%s218 + $0x16c] sm:$0xf] %vm1327, %v1290
      %1420 = vst.msk [vmem:[%s218 + $0x170] sm:$0xf] %vm1327, %v1291
      %1421 = vst.msk [vmem:[%s218 + $0x174] sm:$0xf] %vm1327, %v1292
      %1422 = vst.msk [vmem:[%s218 + $0x178] sm:$0xf] %vm1327, %v1293
      %1423 = vst.msk [vmem:[%s218 + $0x17c] sm:$0xf] %vm1327, %v1294
      %1424 = vst.msk [vmem:[%s218 + $0x180] sm:$0xf] %vm1327, %v1295
      %1425 = vst.msk [vmem:[%s218 + $0x184] sm:$0xf] %vm1327, %v1296
      %1426 = vst.msk [vmem:[%s218 + $0x188] sm:$0xf] %vm1327, %v1297
      %1427 = vst.msk [vmem:[%s218 + $0x18c] sm:$0xf] %vm1327, %v1298
      %1428 = vst.msk [vmem:[%s218 + $0x190] sm:$0xf] %vm1327, %v1299
      %1429 = vst.msk [vmem:[%s218 + $0x194] sm:$0xf] %vm1327, %v1300
      %1430 = vst.msk [vmem:[%s218 + $0x198] sm:$0xf] %vm1327, %v1301
      %1431 = vst.msk [vmem:[%s218 + $0x19c] sm:$0xf] %vm1327, %v1302
      %1432 = vst.msk [vmem:[%s218 + $0x1a0] sm:$0xf] %vm1327, %v1303
      %1433 = vst.msk [vmem:[%s218 + $0x1a4] sm:$0xf] %vm1327, %v1304
      %1434 = vst.msk [vmem:[%s218 + $0x1a8] sm:$0xf] %vm1327, %v1305
      %1435 = vst.msk [vmem:[%s218 + $0x1ac] sm:$0xf] %vm1327, %v1306
      %1436 = vst.msk [vmem:[%s218 + $0x1b0] sm:$0xf] %vm1327, %v1307
      %1437 = vst.msk [vmem:[%s218 + $0x1b4] sm:$0xf] %vm1327, %v1308
      %1438 = vst.msk [vmem:[%s218 + $0x1b8] sm:$0xf] %vm1327, %v1309
      %1439 = vst.msk [vmem:[%s218 + $0x1bc] sm:$0xf] %vm1327, %v1310
      %1440 = vst.msk [vmem:[%s218 + $0x1c0] sm:$0xf] %vm1327, %v1311
      %1441 = vst.msk [vmem:[%s218 + $0x1c4] sm:$0xf] %vm1327, %v1312
      %1442 = vst.msk [vmem:[%s218 + $0x1c8] sm:$0xf] %vm1327, %v1313
      %1443 = vst.msk [vmem:[%s218 + $0x1cc] sm:$0xf] %vm1327, %v1314
      %1444 = vst.msk [vmem:[%s218 + $0x1d0] sm:$0xf] %vm1327, %v1315
      %1445 = vst.msk [vmem:[%s218 + $0x1d4] sm:$0xf] %vm1327, %v1316
      %1446 = vst.msk [vmem:[%s218 + $0x1d8] sm:$0xf] %vm1327, %v1317
      %1447 = vst.msk [vmem:[%s218 + $0x1dc] sm:$0xf] %vm1327, %v1318
      %1448 = vst.msk [vmem:[%s218 + $0x1e0] sm:$0xf] %vm1327, %v1319
      %1449 = vst.msk [vmem:[%s218 + $0x1e4] sm:$0xf] %vm1327, %v1320
      %1450 = vst.msk [vmem:[%s218 + $0x1e8] sm:$0xf] %vm1327, %v1321
      %1451 = vst.msk [vmem:[%s218 + $0x1ec] sm:$0xf] %vm1327, %v1322
      %1452 = vst.msk [vmem:[%s218 + $0x1f0] sm:$0xf] %vm1327, %v1323
      %1453 = vst.msk [vmem:[%s218 + $0x1f4] sm:$0xf] %vm1327, %v1324
      %1454 = vst.msk [vmem:[%s218 + $0x1f8] sm:$0xf] %vm1327, %v1325
      %1455 = vst.msk [vmem:[%s218 + $0x1fc] sm:$0xf] %vm1327, %v1326
      %p1456 = scmp.lt.s32.totalorder %s18, 3
      %s1457 = scalar_select %p1456, %s18, 3
      %p1458 = scmp.lt.s32.totalorder %s19, 0
      %s1459 = scalar_select %p1458, %s19, 0
      %s1460 = smul.addr %s1457, 128
      %s1461 = sadd.s32 %s1459, %s1460
      %s1462 = smul.addr %s1461, 4
      %s1463 = scalar_lea.vmem %s3, %s1462
      // Predicated region
      $region33: #{conv2d.1} parent=31 // pred_check
        %p1464 = pneg %p124
      $region34: #{conv2d.1} parent=31 // pred_check_branch
        %1466 = sbr.rel (%p1464) target = $region36
      $region35: #{conv2d.1} parent=31 // pred_region
        _
      $region36: #{conv2d.1} parent=31 // pred_fallthru
        _
    $region32: #{conv2d.1} parent=5 // pred_fallthru
      _
    %p1467 = scmp.le.s32.totalorder 2, %s9
    // Predicated region
    $region37: #{conv2d.1} parent=5 // pred_check
      %p1468 = pneg %p1467
    $region38: #{conv2d.1} parent=5 // pred_check_branch
      %1470 = sbr.rel (%p1468) target = $region40
    $region39: #{conv2d.1} parent=5 // pred_region
      %s1471 = ssub.s32 %s9, 2
      // Predicated region
      $region41: #{conv2d.1} parent=39 // pred_check
        %p1472 = pneg %p130
      $region42: #{conv2d.1} parent=39 // pred_check_branch
        %1474 = sbr.rel (%p1472) target = $region44
      $region43: #{conv2d.1} parent=39 // pred_region
        %p1475 = scmp.lt.s32.totalorder %s20, 3
        %s1476 = scalar_select %p1475, %s20, 3
        %p1477 = scmp.lt.s32.totalorder %s21, 0
        %s1478 = scalar_select %p1477, %s21, 0
        %s1479 = smul.addr %s1476, 128
        %s1480 = sadd.s32 %s1478, %s1479
        %s1481 = smul.addr %s1480, 4
        %s1482 = scalar_lea.vmem %s3, %s1481
      $region44: #{conv2d.1} parent=39 // pred_fallthru
        _
    $region40: #{conv2d.1} parent=5 // pred_fallthru
      _
  $region6: #{conv2d.1} parent=0 // loop_footer
    %s13 = sadd.s32 1, %s9
  $region7: #{conv2d.1} parent=0 // loop_footer_branch
    %8 = sbr.rel target = $region3
  $region8: #{conv2d.1} parent=0 // loop_exit
    _

</llo_original>
